<compile_context>
chip_gen: v6e
topology: v6e:2x2x1
jax: 0.10.0
libtpu: 0.0.40
codegen_flags: <defaults>
</compile_context>

<pallas_src>
import functools
import math

import jax
import jax.numpy as jnp
from jax.experimental import pallas as pl
from jax.experimental.pallas import tpu as pltpu  # noqa: F401  (TPU backend)


# ----------------------------- Pallas kernel ------------------------------- #

def _transformer_kernel(mask_ref, x_ref,
                        wq_ref, wk_ref, wv_ref, wo_ref,
                        g1_ref, b1_ref,
                        w1_ref, c1_ref, w2_ref, c2_ref,
                        g2_ref, b2_ref,
                        out_ref,
                        *, num_layers, batch, seq, d_model):
    """Whole transformer stack + mean readout in a single grid-less call."""
    x = x_ref[...]                               # (B*S, D) f32 activation slab
    add_mask = mask_ref[...]                     # (B, S, S) f32, layer-invariant

    for l in range(num_layers):                  # static unroll; L is tiny
        xb = x.astype(jnp.bfloat16)

        # --- Q/K/V projections on the flattened slab (bigger MXU M dim) ---
        # 1/sqrt(d) is pre-folded into wq in the wrapper.
        q = jnp.dot(xb, wq_ref[l], preferred_element_type=jnp.float32)
        k = jnp.dot(xb, wk_ref[l], preferred_element_type=jnp.float32)
        v = jnp.dot(xb, wv_ref[l], preferred_element_type=jnp.float32)

        qb = q.reshape(batch, seq, d_model).astype(jnp.bfloat16)
        kb = k.reshape(batch, seq, d_model).astype(jnp.bfloat16)
        vb = v.reshape(batch, seq, d_model).astype(jnp.bfloat16)

        # --- batched attention: one fused score / context computation ---
        s = jnp.einsum('bqd,bkd->bqk', qb, kb,
                       preferred_element_type=jnp.float32) + add_mask
        m = jnp.max(s, axis=-1, keepdims=True)
        p = jnp.exp(s - m)
        attn = p * pl.reciprocal(jnp.sum(p, axis=-1, keepdims=True), approx=True)

        ctx = jnp.einsum('bqk,bkd->bqd', attn.astype(jnp.bfloat16), vb,
                         preferred_element_type=jnp.float32)
        ctx = ctx.reshape(batch * seq, d_model)
        ctx = jnp.dot(ctx.astype(jnp.bfloat16), wo_ref[l],
                      preferred_element_type=jnp.float32)

        # --- residual + LayerNorm 1 (f32) ---
        h = x + ctx
        mu = jnp.mean(h, axis=-1, keepdims=True)
        var = jnp.mean((h - mu) ** 2, axis=-1, keepdims=True)
        h = (h - mu) * jax.lax.rsqrt(var + 1e-5) * g1_ref[l] + b1_ref[l]

        # --- feed-forward (ReLU), bf16 MXU inputs, f32 accumulation ---
        f = jnp.dot(h.astype(jnp.bfloat16), w1_ref[l],
                    preferred_element_type=jnp.float32) + c1_ref[l]
        f = jnp.maximum(f, 0.0)
        f = jnp.dot(f.astype(jnp.bfloat16), w2_ref[l],
                    preferred_element_type=jnp.float32) + c2_ref[l]

        # --- residual + LayerNorm 2 (f32) ---
        h2 = h + f
        mu2 = jnp.mean(h2, axis=-1, keepdims=True)
        var2 = jnp.mean((h2 - mu2) ** 2, axis=-1, keepdims=True)
        x = (h2 - mu2) * jax.lax.rsqrt(var2 + 1e-5) * g2_ref[l] + b2_ref[l]

    # --- fused readout: mean over the sequence dim ---
    out_ref[...] = jnp.mean(x.reshape(batch, seq, d_model), axis=1)


# ------------------------------ wrapper ------------------------------------ #

def transformer_forward(seq_emds, pad_masks, causal_masks, layer_params):
    """Transformer.forward: stack of GCT layers followed by mean over dim=1."""
    B, S, D = seq_emds.shape
    L = len(layer_params)

    scale = 1.0 / math.sqrt(D)

    def stack(name, dtype, scale_by=1.0):
        w = jnp.stack([p[name] for p in layer_params]).astype(jnp.float32) * scale_by
        return w.astype(dtype)

    # Weights to bf16 (bf16 MXU peak, half the DMA); fold 1/sqrt(d) into Wq.
    wq = stack("wq", jnp.bfloat16, scale)
    wk = stack("wk", jnp.bfloat16)
    wv = stack("wv", jnp.bfloat16)
    wo = stack("wo", jnp.bfloat16)
    w1 = stack("w1", jnp.bfloat16)
    w2 = stack("w2", jnp.bfloat16)
    # LN params and biases stay f32 (added to f32 accumulations).
    g1 = stack("g1", jnp.float32)
    b1 = stack("b1", jnp.float32)
    c1 = stack("c1", jnp.float32)
    c2 = stack("c2", jnp.float32)
    g2 = stack("g2", jnp.float32)
    b2 = stack("b2", jnp.float32)

    x_flat = seq_emds.reshape(B * S, D).astype(jnp.float32)

    # Layer-invariant additive pad+causal mask, built once outside the kernel.
    keep = (pad_masks.astype(jnp.float32)[:, None, :]
            * causal_masks.astype(jnp.float32)[None, :, :])        # (B, S, S)
    add_mask = (1.0 - keep) * jnp.float32(-1e9)

    kernel = functools.partial(_transformer_kernel,
                               num_layers=L, batch=B, seq=S, d_model=D)

    # Grid-less call: every operand (masks, activations, all L layers of
    # weights) is a whole-array VMEM block; total footprint is well under the
    # default scoped-VMEM limit on every TPU generation, so no explicit
    # vmem_limit_bytes and no per-layer pipeline overhead.
    return pl.pallas_call(
        kernel,
        out_shape=jax.ShapeDtypeStruct((B, D), jnp.float32),
    )(add_mask, x_flat, wq, wk, wv, wo, g1, b1, w1, c1, w2, c2, g2, b2)


# --------------------------- parameter creation ----------------------------- #

def init_layer_params(key, d_model, d_ff):
    ks = jax.random.split(key, 6)
    s_attn = 1.0 / math.sqrt(d_model)
    s_ff = 1.0 / math.sqrt(d_ff)
    return {
        "wq": jax.random.normal(ks[0], (d_model, d_model), jnp.float32) * s_attn,
        "wk": jax.random.normal(ks[1], (d_model, d_model), jnp.float32) * s_attn,
        "wv": jax.random.normal(ks[2], (d_model, d_model), jnp.float32) * s_attn,
        "wo": jax.random.normal(ks[3], (d_model, d_model), jnp.float32) * s_attn,
        "g1": jnp.ones((1, d_model), jnp.float32),
        "b1": jnp.zeros((1, d_model), jnp.float32),
        "w1": jax.random.normal(ks[4], (d_model, d_ff), jnp.float32) * s_attn,
        "c1": jnp.zeros((1, d_ff), jnp.float32),
        "w2": jax.random.normal(ks[5], (d_ff, d_model), jnp.float32) * s_ff,
        "c2": jnp.zeros((1, d_model), jnp.float32),
        "g2": jnp.ones((1, d_model), jnp.float32),
        "b2": jnp.zeros((1, d_model), jnp.float32),
    }


# ---------------------------------- main ------------------------------------ #

if __name__ == "__main__":
    B, S, D = 2, 8, 32
    NUM_LAYERS = 2
    D_FF = 4 * D

    key = jax.random.PRNGKey(0)
    k_x, k_p = jax.random.split(key)

    seq_emds = jax.random.normal(k_x, (B, S, D), jnp.float32)

    # pad mask: last 2 tokens of the second sequence are padding
    pad_masks = jnp.ones((B, S), jnp.float32)
    pad_masks = pad_masks.at[1, S - 2:].set(0.0)

    # causal mask: lower triangular
    causal_masks = jnp.tril(jnp.ones((S, S), jnp.float32))

    layer_keys = jax.random.split(k_p, NUM_LAYERS)
    layer_params = [init_layer_params(k, D, D_FF) for k in layer_keys]

    out = transformer_forward(seq_emds, pad_masks, causal_masks, layer_params)
    out = jax.block_until_ready(out)

    assert out.shape == (B, D), out.shape
    assert bool(jnp.all(jnp.isfinite(out)))
    print("KERNEL_OK")
</pallas_src>

<mosaic_0001>
module attributes {stable_mosaic.version = 11 : i64} {
  func.func @_transformer_kernel(%arg0: memref<2x8x8xf32, #tpu.memory_space<vmem>>, %arg1: memref<16x32xf32, #tpu.memory_space<vmem>>, %arg2: memref<2x32x32xbf16, #tpu.memory_space<vmem>>, %arg3: memref<2x32x32xbf16, #tpu.memory_space<vmem>>, %arg4: memref<2x32x32xbf16, #tpu.memory_space<vmem>>, %arg5: memref<2x32x32xbf16, #tpu.memory_space<vmem>>, %arg6: memref<2x1x32xf32, #tpu.memory_space<vmem>>, %arg7: memref<2x1x32xf32, #tpu.memory_space<vmem>>, %arg8: memref<2x32x128xbf16, #tpu.memory_space<vmem>>, %arg9: memref<2x1x128xf32, #tpu.memory_space<vmem>>, %arg10: memref<2x128x32xbf16, #tpu.memory_space<vmem>>, %arg11: memref<2x1x32xf32, #tpu.memory_space<vmem>>, %arg12: memref<2x1x32xf32, #tpu.memory_space<vmem>>, %arg13: memref<2x1x32xf32, #tpu.memory_space<vmem>>, %arg14: memref<2x32xf32, #tpu.memory_space<vmem>>) attributes {dimension_semantics = [], scalar_prefetch = 0 : i64, scratch_operands = 0 : i64, tpu.core_type = #tpu.core_type<tc>} {
    %c0 = arith.constant 0 : index
    %c0_0 = arith.constant 0 : index
    %0 = vector.load %arg1[%c0, %c0_0] : memref<16x32xf32, #tpu.memory_space<vmem>>, vector<16x32xf32>
    %c0_1 = arith.constant 0 : index
    %c0_2 = arith.constant 0 : index
    %c0_3 = arith.constant 0 : index
    %1 = vector.load %arg0[%c0_1, %c0_2, %c0_3] : memref<2x8x8xf32, #tpu.memory_space<vmem>>, vector<2x8x8xf32>
    %2 = arith.truncf %0 : vector<16x32xf32> to vector<16x32xbf16>
    %c0_4 = arith.constant 0 : index
    %c0_5 = arith.constant 0 : index
    %c0_6 = arith.constant 0 : index
    %3 = vector.load %arg2[%c0_4, %c0_5, %c0_6] : memref<2x32x32xbf16, #tpu.memory_space<vmem>>, vector<1x32x32xbf16>
    %4 = vector.shape_cast %3 : vector<1x32x32xbf16> to vector<32x32xbf16>
    %cst = arith.constant dense<0.000000e+00> : vector<16x32xf32>
    %5 = tpu.matmul %2, %4, %cst {dimension_numbers = #tpu.dot_dimension_numbers<[1], [0], [0], [1], [0, 0, 1, 1], [], []>} : vector<16x32xbf16>, vector<32x32xbf16>, vector<16x32xf32> -> vector<16x32xf32>
    %c0_7 = arith.constant 0 : index
    %c0_8 = arith.constant 0 : index
    %c0_9 = arith.constant 0 : index
    %6 = vector.load %arg3[%c0_7, %c0_8, %c0_9] : memref<2x32x32xbf16, #tpu.memory_space<vmem>>, vector<1x32x32xbf16>
    %7 = vector.shape_cast %6 : vector<1x32x32xbf16> to vector<32x32xbf16>
    %cst_10 = arith.constant dense<0.000000e+00> : vector<16x32xf32>
    %8 = tpu.matmul %2, %7, %cst_10 {dimension_numbers = #tpu.dot_dimension_numbers<[1], [0], [0], [1], [0, 0, 1, 1], [], []>} : vector<16x32xbf16>, vector<32x32xbf16>, vector<16x32xf32> -> vector<16x32xf32>
    %c0_11 = arith.constant 0 : index
    %c0_12 = arith.constant 0 : index
    %c0_13 = arith.constant 0 : index
    %9 = vector.load %arg4[%c0_11, %c0_12, %c0_13] : memref<2x32x32xbf16, #tpu.memory_space<vmem>>, vector<1x32x32xbf16>
    %10 = vector.shape_cast %9 : vector<1x32x32xbf16> to vector<32x32xbf16>
    %cst_14 = arith.constant dense<0.000000e+00> : vector<16x32xf32>
    %11 = tpu.matmul %2, %10, %cst_14 {dimension_numbers = #tpu.dot_dimension_numbers<[1], [0], [0], [1], [0, 0, 1, 1], [], []>} : vector<16x32xbf16>, vector<32x32xbf16>, vector<16x32xf32> -> vector<16x32xf32>
    %12 = vector.shape_cast %5 : vector<16x32xf32> to vector<2x8x32xf32>
    %13 = arith.truncf %12 : vector<2x8x32xf32> to vector<2x8x32xbf16>
    %14 = vector.shape_cast %8 : vector<16x32xf32> to vector<2x8x32xf32>
    %15 = arith.truncf %14 : vector<2x8x32xf32> to vector<2x8x32xbf16>
    %16 = vector.shape_cast %11 : vector<16x32xf32> to vector<2x8x32xf32>
    %17 = arith.truncf %16 : vector<2x8x32xf32> to vector<2x8x32xbf16>
    "tpu.trace_start"() <{level = 10 : i32, message = "bqd,bkd->bqk"}> : () -> ()
    %cst_15 = arith.constant dense<0.000000e+00> : vector<2x8x8xf32>
    %18 = tpu.matmul %13, %15, %cst_15 {dimension_numbers = #tpu.dot_dimension_numbers<[2], [2], [1], [1], [0, 0, 0, 1, 1, 1], [0], [0]>} : vector<2x8x32xbf16>, vector<2x8x32xbf16>, vector<2x8x8xf32> -> vector<2x8x8xf32>
    "tpu.trace_stop"() : () -> ()
    %19 = arith.addf %18, %1 : vector<2x8x8xf32>
    %cst_16 = arith.constant dense<0xFF800000> : vector<2x8xf32>
    %20 = vector.multi_reduction <maximumf>, %19, %cst_16 [2] : vector<2x8x8xf32> to vector<2x8xf32>
    %21 = vector.shape_cast %20 : vector<2x8xf32> to vector<2x8x1xf32>
    %22 = vector.broadcast %21 : vector<2x8x1xf32> to vector<2x8x8xf32>
    %23 = arith.subf %19, %22 : vector<2x8x8xf32>
    %24 = math.exp %23 : vector<2x8x8xf32>
    %cst_17 = arith.constant dense<0.000000e+00> : vector<2x8xf32>
    %25 = vector.multi_reduction <add>, %24, %cst_17 [2] : vector<2x8x8xf32> to vector<2x8xf32>
    %26 = vector.shape_cast %25 : vector<2x8xf32> to vector<2x8x1xf32>
    %27 = tpu.reciprocal %26 {approx = true} : vector<2x8x1xf32> -> vector<2x8x1xf32>
    %28 = vector.broadcast %27 : vector<2x8x1xf32> to vector<2x8x8xf32>
    %29 = arith.mulf %24, %28 : vector<2x8x8xf32>
    %30 = arith.truncf %29 : vector<2x8x8xf32> to vector<2x8x8xbf16>
    "tpu.trace_start"() <{level = 10 : i32, message = "bqk,bkd->bqd"}> : () -> ()
    %cst_18 = arith.constant dense<0.000000e+00> : vector<2x8x32xf32>
    %31 = tpu.matmul %30, %17, %cst_18 {dimension_numbers = #tpu.dot_dimension_numbers<[2], [1], [1], [2], [0, 0, 0, 1, 1, 2], [0], [0]>} : vector<2x8x8xbf16>, vector<2x8x32xbf16>, vector<2x8x32xf32> -> vector<2x8x32xf32>
    "tpu.trace_stop"() : () -> ()
    %32 = vector.shape_cast %31 : vector<2x8x32xf32> to vector<16x32xf32>
    %33 = arith.truncf %32 : vector<16x32xf32> to vector<16x32xbf16>
    %c0_19 = arith.constant 0 : index
    %c0_20 = arith.constant 0 : index
    %c0_21 = arith.constant 0 : index
    %34 = vector.load %arg5[%c0_19, %c0_20, %c0_21] : memref<2x32x32xbf16, #tpu.memory_space<vmem>>, vector<1x32x32xbf16>
    %35 = vector.shape_cast %34 : vector<1x32x32xbf16> to vector<32x32xbf16>
    %cst_22 = arith.constant dense<0.000000e+00> : vector<16x32xf32>
    %36 = tpu.matmul %33, %35, %cst_22 {dimension_numbers = #tpu.dot_dimension_numbers<[1], [0], [0], [1], [0, 0, 1, 1], [], []>} : vector<16x32xbf16>, vector<32x32xbf16>, vector<16x32xf32> -> vector<16x32xf32>
    %37 = arith.addf %0, %36 : vector<16x32xf32>
    %cst_23 = arith.constant dense<0.000000e+00> : vector<16xf32>
    %38 = vector.multi_reduction <add>, %37, %cst_23 [1] : vector<16x32xf32> to vector<16xf32>
    %39 = vector.shape_cast %38 : vector<16xf32> to vector<16x1xf32>
    %cst_24 = arith.constant 3.200000e+01 : f32
    %40 = vector.broadcast %cst_24 : f32 to vector<16x1xf32>
    %41 = arith.divf %39, %40 : vector<16x1xf32>
    %42 = vector.broadcast %41 : vector<16x1xf32> to vector<16x32xf32>
    %43 = arith.subf %37, %42 : vector<16x32xf32>
    %44 = arith.mulf %43, %43 : vector<16x32xf32>
    %cst_25 = arith.constant dense<0.000000e+00> : vector<16xf32>
    %45 = vector.multi_reduction <add>, %44, %cst_25 [1] : vector<16x32xf32> to vector<16xf32>
    %46 = vector.shape_cast %45 : vector<16xf32> to vector<16x1xf32>
    %cst_26 = arith.constant 3.200000e+01 : f32
    %47 = vector.broadcast %cst_26 : f32 to vector<16x1xf32>
    %48 = arith.divf %46, %47 : vector<16x1xf32>
    %49 = vector.broadcast %41 : vector<16x1xf32> to vector<16x32xf32>
    %50 = arith.subf %37, %49 : vector<16x32xf32>
    %cst_27 = arith.constant 9.99999974E-6 : f32
    %51 = vector.broadcast %cst_27 : f32 to vector<16x1xf32>
    %52 = arith.addf %48, %51 : vector<16x1xf32>
    %53 = math.rsqrt %52 : vector<16x1xf32>
    %54 = vector.broadcast %53 : vector<16x1xf32> to vector<16x32xf32>
    %55 = arith.mulf %50, %54 : vector<16x32xf32>
    %c0_28 = arith.constant 0 : index
    %c0_29 = arith.constant 0 : index
    %c0_30 = arith.constant 0 : index
    %56 = vector.load %arg6[%c0_28, %c0_29, %c0_30] : memref<2x1x32xf32, #tpu.memory_space<vmem>>, vector<1x1x32xf32>
    %57 = vector.shape_cast %56 : vector<1x1x32xf32> to vector<1x32xf32>
    %58 = vector.broadcast %57 : vector<1x32xf32> to vector<16x32xf32>
    %59 = arith.mulf %55, %58 : vector<16x32xf32>
    %c0_31 = arith.constant 0 : index
    %c0_32 = arith.constant 0 : index
    %c0_33 = arith.constant 0 : index
    %60 = vector.load %arg7[%c0_31, %c0_32, %c0_33] : memref<2x1x32xf32, #tpu.memory_space<vmem>>, vector<1x1x32xf32>
    %61 = vector.shape_cast %60 : vector<1x1x32xf32> to vector<1x32xf32>
    %62 = vector.broadcast %61 : vector<1x32xf32> to vector<16x32xf32>
    %63 = arith.addf %59, %62 : vector<16x32xf32>
    %64 = arith.truncf %63 : vector<16x32xf32> to vector<16x32xbf16>
    %c0_34 = arith.constant 0 : index
    %c0_35 = arith.constant 0 : index
    %c0_36 = arith.constant 0 : index
    %65 = vector.load %arg8[%c0_34, %c0_35, %c0_36] : memref<2x32x128xbf16, #tpu.memory_space<vmem>>, vector<1x32x128xbf16>
    %66 = vector.shape_cast %65 : vector<1x32x128xbf16> to vector<32x128xbf16>
    %cst_37 = arith.constant dense<0.000000e+00> : vector<16x128xf32>
    %67 = tpu.matmul %64, %66, %cst_37 {dimension_numbers = #tpu.dot_dimension_numbers<[1], [0], [0], [1], [0, 0, 1, 1], [], []>} : vector<16x32xbf16>, vector<32x128xbf16>, vector<16x128xf32> -> vector<16x128xf32>
    %c0_38 = arith.constant 0 : index
    %c0_39 = arith.constant 0 : index
    %c0_40 = arith.constant 0 : index
    %68 = vector.load %arg9[%c0_38, %c0_39, %c0_40] : memref<2x1x128xf32, #tpu.memory_space<vmem>>, vector<1x1x128xf32>
    %69 = vector.shape_cast %68 : vector<1x1x128xf32> to vector<1x128xf32>
    %70 = vector.broadcast %69 : vector<1x128xf32> to vector<16x128xf32>
    %71 = arith.addf %67, %70 : vector<16x128xf32>
    %cst_41 = arith.constant 0.000000e+00 : f32
    %72 = vector.broadcast %cst_41 : f32 to vector<16x128xf32>
    %73 = arith.maximumf %71, %72 : vector<16x128xf32>
    %74 = arith.truncf %73 : vector<16x128xf32> to vector<16x128xbf16>
    %c0_42 = arith.constant 0 : index
    %c0_43 = arith.constant 0 : index
    %c0_44 = arith.constant 0 : index
    %75 = vector.load %arg10[%c0_42, %c0_43, %c0_44] : memref<2x128x32xbf16, #tpu.memory_space<vmem>>, vector<1x128x32xbf16>
    %76 = vector.shape_cast %75 : vector<1x128x32xbf16> to vector<128x32xbf16>
    %cst_45 = arith.constant dense<0.000000e+00> : vector<16x32xf32>
    %77 = tpu.matmul %74, %76, %cst_45 {dimension_numbers = #tpu.dot_dimension_numbers<[1], [0], [0], [1], [0, 0, 1, 1], [], []>} : vector<16x128xbf16>, vector<128x32xbf16>, vector<16x32xf32> -> vector<16x32xf32>
    %c0_46 = arith.constant 0 : index
    %c0_47 = arith.constant 0 : index
    %c0_48 = arith.constant 0 : index
    %78 = vector.load %arg11[%c0_46, %c0_47, %c0_48] : memref<2x1x32xf32, #tpu.memory_space<vmem>>, vector<1x1x32xf32>
    %79 = vector.shape_cast %78 : vector<1x1x32xf32> to vector<1x32xf32>
    %80 = vector.broadcast %79 : vector<1x32xf32> to vector<16x32xf32>
    %81 = arith.addf %77, %80 : vector<16x32xf32>
    %82 = arith.addf %63, %81 : vector<16x32xf32>
    %cst_49 = arith.constant dense<0.000000e+00> : vector<16xf32>
    %83 = vector.multi_reduction <add>, %82, %cst_49 [1] : vector<16x32xf32> to vector<16xf32>
    %84 = vector.shape_cast %83 : vector<16xf32> to vector<16x1xf32>
    %cst_50 = arith.constant 3.200000e+01 : f32
    %85 = vector.broadcast %cst_50 : f32 to vector<16x1xf32>
    %86 = arith.divf %84, %85 : vector<16x1xf32>
    %87 = vector.broadcast %86 : vector<16x1xf32> to vector<16x32xf32>
    %88 = arith.subf %82, %87 : vector<16x32xf32>
    %89 = arith.mulf %88, %88 : vector<16x32xf32>
    %cst_51 = arith.constant dense<0.000000e+00> : vector<16xf32>
    %90 = vector.multi_reduction <add>, %89, %cst_51 [1] : vector<16x32xf32> to vector<16xf32>
    %91 = vector.shape_cast %90 : vector<16xf32> to vector<16x1xf32>
    %cst_52 = arith.constant 3.200000e+01 : f32
    %92 = vector.broadcast %cst_52 : f32 to vector<16x1xf32>
    %93 = arith.divf %91, %92 : vector<16x1xf32>
    %94 = vector.broadcast %86 : vector<16x1xf32> to vector<16x32xf32>
    %95 = arith.subf %82, %94 : vector<16x32xf32>
    %cst_53 = arith.constant 9.99999974E-6 : f32
    %96 = vector.broadcast %cst_53 : f32 to vector<16x1xf32>
    %97 = arith.addf %93, %96 : vector<16x1xf32>
    %98 = math.rsqrt %97 : vector<16x1xf32>
    %99 = vector.broadcast %98 : vector<16x1xf32> to vector<16x32xf32>
    %100 = arith.mulf %95, %99 : vector<16x32xf32>
    %c0_54 = arith.constant 0 : index
    %c0_55 = arith.constant 0 : index
    %c0_56 = arith.constant 0 : index
    %101 = vector.load %arg12[%c0_54, %c0_55, %c0_56] : memref<2x1x32xf32, #tpu.memory_space<vmem>>, vector<1x1x32xf32>
    %102 = vector.shape_cast %101 : vector<1x1x32xf32> to vector<1x32xf32>
    %103 = vector.broadcast %102 : vector<1x32xf32> to vector<16x32xf32>
    %104 = arith.mulf %100, %103 : vector<16x32xf32>
    %c0_57 = arith.constant 0 : index
    %c0_58 = arith.constant 0 : index
    %c0_59 = arith.constant 0 : index
    %105 = vector.load %arg13[%c0_57, %c0_58, %c0_59] : memref<2x1x32xf32, #tpu.memory_space<vmem>>, vector<1x1x32xf32>
    %106 = vector.shape_cast %105 : vector<1x1x32xf32> to vector<1x32xf32>
    %107 = vector.broadcast %106 : vector<1x32xf32> to vector<16x32xf32>
    %108 = arith.addf %104, %107 : vector<16x32xf32>
    %109 = arith.truncf %108 : vector<16x32xf32> to vector<16x32xbf16>
    %c1 = arith.constant 1 : index
    %c0_60 = arith.constant 0 : index
    %c0_61 = arith.constant 0 : index
    %110 = vector.load %arg2[%c1, %c0_60, %c0_61] : memref<2x32x32xbf16, #tpu.memory_space<vmem>>, vector<1x32x32xbf16>
    %111 = vector.shape_cast %110 : vector<1x32x32xbf16> to vector<32x32xbf16>
    %cst_62 = arith.constant dense<0.000000e+00> : vector<16x32xf32>
    %112 = tpu.matmul %109, %111, %cst_62 {dimension_numbers = #tpu.dot_dimension_numbers<[1], [0], [0], [1], [0, 0, 1, 1], [], []>} : vector<16x32xbf16>, vector<32x32xbf16>, vector<16x32xf32> -> vector<16x32xf32>
    %c1_63 = arith.constant 1 : index
    %c0_64 = arith.constant 0 : index
    %c0_65 = arith.constant 0 : index
    %113 = vector.load %arg3[%c1_63, %c0_64, %c0_65] : memref<2x32x32xbf16, #tpu.memory_space<vmem>>, vector<1x32x32xbf16>
    %114 = vector.shape_cast %113 : vector<1x32x32xbf16> to vector<32x32xbf16>
    %cst_66 = arith.constant dense<0.000000e+00> : vector<16x32xf32>
    %115 = tpu.matmul %109, %114, %cst_66 {dimension_numbers = #tpu.dot_dimension_numbers<[1], [0], [0], [1], [0, 0, 1, 1], [], []>} : vector<16x32xbf16>, vector<32x32xbf16>, vector<16x32xf32> -> vector<16x32xf32>
    %c1_67 = arith.constant 1 : index
    %c0_68 = arith.constant 0 : index
    %c0_69 = arith.constant 0 : index
    %116 = vector.load %arg4[%c1_67, %c0_68, %c0_69] : memref<2x32x32xbf16, #tpu.memory_space<vmem>>, vector<1x32x32xbf16>
    %117 = vector.shape_cast %116 : vector<1x32x32xbf16> to vector<32x32xbf16>
    %cst_70 = arith.constant dense<0.000000e+00> : vector<16x32xf32>
    %118 = tpu.matmul %109, %117, %cst_70 {dimension_numbers = #tpu.dot_dimension_numbers<[1], [0], [0], [1], [0, 0, 1, 1], [], []>} : vector<16x32xbf16>, vector<32x32xbf16>, vector<16x32xf32> -> vector<16x32xf32>
    %119 = vector.shape_cast %112 : vector<16x32xf32> to vector<2x8x32xf32>
    %120 = arith.truncf %119 : vector<2x8x32xf32> to vector<2x8x32xbf16>
    %121 = vector.shape_cast %115 : vector<16x32xf32> to vector<2x8x32xf32>
    %122 = arith.truncf %121 : vector<2x8x32xf32> to vector<2x8x32xbf16>
    %123 = vector.shape_cast %118 : vector<16x32xf32> to vector<2x8x32xf32>
    %124 = arith.truncf %123 : vector<2x8x32xf32> to vector<2x8x32xbf16>
    "tpu.trace_start"() <{level = 10 : i32, message = "bqd,bkd->bqk"}> : () -> ()
    %cst_71 = arith.constant dense<0.000000e+00> : vector<2x8x8xf32>
    %125 = tpu.matmul %120, %122, %cst_71 {dimension_numbers = #tpu.dot_dimension_numbers<[2], [2], [1], [1], [0, 0, 0, 1, 1, 1], [0], [0]>} : vector<2x8x32xbf16>, vector<2x8x32xbf16>, vector<2x8x8xf32> -> vector<2x8x8xf32>
    "tpu.trace_stop"() : () -> ()
    %126 = arith.addf %125, %1 : vector<2x8x8xf32>
    %cst_72 = arith.constant dense<0xFF800000> : vector<2x8xf32>
    %127 = vector.multi_reduction <maximumf>, %126, %cst_72 [2] : vector<2x8x8xf32> to vector<2x8xf32>
    %128 = vector.shape_cast %127 : vector<2x8xf32> to vector<2x8x1xf32>
    %129 = vector.broadcast %128 : vector<2x8x1xf32> to vector<2x8x8xf32>
    %130 = arith.subf %126, %129 : vector<2x8x8xf32>
    %131 = math.exp %130 : vector<2x8x8xf32>
    %cst_73 = arith.constant dense<0.000000e+00> : vector<2x8xf32>
    %132 = vector.multi_reduction <add>, %131, %cst_73 [2] : vector<2x8x8xf32> to vector<2x8xf32>
    %133 = vector.shape_cast %132 : vector<2x8xf32> to vector<2x8x1xf32>
    %134 = tpu.reciprocal %133 {approx = true} : vector<2x8x1xf32> -> vector<2x8x1xf32>
    %135 = vector.broadcast %134 : vector<2x8x1xf32> to vector<2x8x8xf32>
    %136 = arith.mulf %131, %135 : vector<2x8x8xf32>
    %137 = arith.truncf %136 : vector<2x8x8xf32> to vector<2x8x8xbf16>
    "tpu.trace_start"() <{level = 10 : i32, message = "bqk,bkd->bqd"}> : () -> ()
    %cst_74 = arith.constant dense<0.000000e+00> : vector<2x8x32xf32>
    %138 = tpu.matmul %137, %124, %cst_74 {dimension_numbers = #tpu.dot_dimension_numbers<[2], [1], [1], [2], [0, 0, 0, 1, 1, 2], [0], [0]>} : vector<2x8x8xbf16>, vector<2x8x32xbf16>, vector<2x8x32xf32> -> vector<2x8x32xf32>
    "tpu.trace_stop"() : () -> ()
    %139 = vector.shape_cast %138 : vector<2x8x32xf32> to vector<16x32xf32>
    %140 = arith.truncf %139 : vector<16x32xf32> to vector<16x32xbf16>
    %c1_75 = arith.constant 1 : index
    %c0_76 = arith.constant 0 : index
    %c0_77 = arith.constant 0 : index
    %141 = vector.load %arg5[%c1_75, %c0_76, %c0_77] : memref<2x32x32xbf16, #tpu.memory_space<vmem>>, vector<1x32x32xbf16>
    %142 = vector.shape_cast %141 : vector<1x32x32xbf16> to vector<32x32xbf16>
    %cst_78 = arith.constant dense<0.000000e+00> : vector<16x32xf32>
    %143 = tpu.matmul %140, %142, %cst_78 {dimension_numbers = #tpu.dot_dimension_numbers<[1], [0], [0], [1], [0, 0, 1, 1], [], []>} : vector<16x32xbf16>, vector<32x32xbf16>, vector<16x32xf32> -> vector<16x32xf32>
    %144 = arith.addf %108, %143 : vector<16x32xf32>
    %cst_79 = arith.constant dense<0.000000e+00> : vector<16xf32>
    %145 = vector.multi_reduction <add>, %144, %cst_79 [1] : vector<16x32xf32> to vector<16xf32>
    %146 = vector.shape_cast %145 : vector<16xf32> to vector<16x1xf32>
    %cst_80 = arith.constant 3.200000e+01 : f32
    %147 = vector.broadcast %cst_80 : f32 to vector<16x1xf32>
    %148 = arith.divf %146, %147 : vector<16x1xf32>
    %149 = vector.broadcast %148 : vector<16x1xf32> to vector<16x32xf32>
    %150 = arith.subf %144, %149 : vector<16x32xf32>
    %151 = arith.mulf %150, %150 : vector<16x32xf32>
    %cst_81 = arith.constant dense<0.000000e+00> : vector<16xf32>
    %152 = vector.multi_reduction <add>, %151, %cst_81 [1] : vector<16x32xf32> to vector<16xf32>
    %153 = vector.shape_cast %152 : vector<16xf32> to vector<16x1xf32>
    %cst_82 = arith.constant 3.200000e+01 : f32
    %154 = vector.broadcast %cst_82 : f32 to vector<16x1xf32>
    %155 = arith.divf %153, %154 : vector<16x1xf32>
    %156 = vector.broadcast %148 : vector<16x1xf32> to vector<16x32xf32>
    %157 = arith.subf %144, %156 : vector<16x32xf32>
    %cst_83 = arith.constant 9.99999974E-6 : f32
    %158 = vector.broadcast %cst_83 : f32 to vector<16x1xf32>
    %159 = arith.addf %155, %158 : vector<16x1xf32>
    %160 = math.rsqrt %159 : vector<16x1xf32>
    %161 = vector.broadcast %160 : vector<16x1xf32> to vector<16x32xf32>
    %162 = arith.mulf %157, %161 : vector<16x32xf32>
    %c1_84 = arith.constant 1 : index
    %c0_85 = arith.constant 0 : index
    %c0_86 = arith.constant 0 : index
    %163 = vector.load %arg6[%c1_84, %c0_85, %c0_86] : memref<2x1x32xf32, #tpu.memory_space<vmem>>, vector<1x1x32xf32>
    %164 = vector.shape_cast %163 : vector<1x1x32xf32> to vector<1x32xf32>
    %165 = vector.broadcast %164 : vector<1x32xf32> to vector<16x32xf32>
    %166 = arith.mulf %162, %165 : vector<16x32xf32>
    %c1_87 = arith.constant 1 : index
    %c0_88 = arith.constant 0 : index
    %c0_89 = arith.constant 0 : index
    %167 = vector.load %arg7[%c1_87, %c0_88, %c0_89] : memref<2x1x32xf32, #tpu.memory_space<vmem>>, vector<1x1x32xf32>
    %168 = vector.shape_cast %167 : vector<1x1x32xf32> to vector<1x32xf32>
    %169 = vector.broadcast %168 : vector<1x32xf32> to vector<16x32xf32>
    %170 = arith.addf %166, %169 : vector<16x32xf32>
    %171 = arith.truncf %170 : vector<16x32xf32> to vector<16x32xbf16>
    %c1_90 = arith.constant 1 : index
    %c0_91 = arith.constant 0 : index
    %c0_92 = arith.constant 0 : index
    %172 = vector.load %arg8[%c1_90, %c0_91, %c0_92] : memref<2x32x128xbf16, #tpu.memory_space<vmem>>, vector<1x32x128xbf16>
    %173 = vector.shape_cast %172 : vector<1x32x128xbf16> to vector<32x128xbf16>
    %cst_93 = arith.constant dense<0.000000e+00> : vector<16x128xf32>
    %174 = tpu.matmul %171, %173, %cst_93 {dimension_numbers = #tpu.dot_dimension_numbers<[1], [0], [0], [1], [0, 0, 1, 1], [], []>} : vector<16x32xbf16>, vector<32x128xbf16>, vector<16x128xf32> -> vector<16x128xf32>
    %c1_94 = arith.constant 1 : index
    %c0_95 = arith.constant 0 : index
    %c0_96 = arith.constant 0 : index
    %175 = vector.load %arg9[%c1_94, %c0_95, %c0_96] : memref<2x1x128xf32, #tpu.memory_space<vmem>>, vector<1x1x128xf32>
    %176 = vector.shape_cast %175 : vector<1x1x128xf32> to vector<1x128xf32>
    %177 = vector.broadcast %176 : vector<1x128xf32> to vector<16x128xf32>
    %178 = arith.addf %174, %177 : vector<16x128xf32>
    %cst_97 = arith.constant 0.000000e+00 : f32
    %179 = vector.broadcast %cst_97 : f32 to vector<16x128xf32>
    %180 = arith.maximumf %178, %179 : vector<16x128xf32>
    %181 = arith.truncf %180 : vector<16x128xf32> to vector<16x128xbf16>
    %c1_98 = arith.constant 1 : index
    %c0_99 = arith.constant 0 : index
    %c0_100 = arith.constant 0 : index
    %182 = vector.load %arg10[%c1_98, %c0_99, %c0_100] : memref<2x128x32xbf16, #tpu.memory_space<vmem>>, vector<1x128x32xbf16>
    %183 = vector.shape_cast %182 : vector<1x128x32xbf16> to vector<128x32xbf16>
    %cst_101 = arith.constant dense<0.000000e+00> : vector<16x32xf32>
    %184 = tpu.matmul %181, %183, %cst_101 {dimension_numbers = #tpu.dot_dimension_numbers<[1], [0], [0], [1], [0, 0, 1, 1], [], []>} : vector<16x128xbf16>, vector<128x32xbf16>, vector<16x32xf32> -> vector<16x32xf32>
    %c1_102 = arith.constant 1 : index
    %c0_103 = arith.constant 0 : index
    %c0_104 = arith.constant 0 : index
    %185 = vector.load %arg11[%c1_102, %c0_103, %c0_104] : memref<2x1x32xf32, #tpu.memory_space<vmem>>, vector<1x1x32xf32>
    %186 = vector.shape_cast %185 : vector<1x1x32xf32> to vector<1x32xf32>
    %187 = vector.broadcast %186 : vector<1x32xf32> to vector<16x32xf32>
    %188 = arith.addf %184, %187 : vector<16x32xf32>
    %189 = arith.addf %170, %188 : vector<16x32xf32>
    %cst_105 = arith.constant dense<0.000000e+00> : vector<16xf32>
    %190 = vector.multi_reduction <add>, %189, %cst_105 [1] : vector<16x32xf32> to vector<16xf32>
    %191 = vector.shape_cast %190 : vector<16xf32> to vector<16x1xf32>
    %cst_106 = arith.constant 3.200000e+01 : f32
    %192 = vector.broadcast %cst_106 : f32 to vector<16x1xf32>
    %193 = arith.divf %191, %192 : vector<16x1xf32>
    %194 = vector.broadcast %193 : vector<16x1xf32> to vector<16x32xf32>
    %195 = arith.subf %189, %194 : vector<16x32xf32>
    %196 = arith.mulf %195, %195 : vector<16x32xf32>
    %cst_107 = arith.constant dense<0.000000e+00> : vector<16xf32>
    %197 = vector.multi_reduction <add>, %196, %cst_107 [1] : vector<16x32xf32> to vector<16xf32>
    %198 = vector.shape_cast %197 : vector<16xf32> to vector<16x1xf32>
    %cst_108 = arith.constant 3.200000e+01 : f32
    %199 = vector.broadcast %cst_108 : f32 to vector<16x1xf32>
    %200 = arith.divf %198, %199 : vector<16x1xf32>
    %201 = vector.broadcast %193 : vector<16x1xf32> to vector<16x32xf32>
    %202 = arith.subf %189, %201 : vector<16x32xf32>
    %cst_109 = arith.constant 9.99999974E-6 : f32
    %203 = vector.broadcast %cst_109 : f32 to vector<16x1xf32>
    %204 = arith.addf %200, %203 : vector<16x1xf32>
    %205 = math.rsqrt %204 : vector<16x1xf32>
    %206 = vector.broadcast %205 : vector<16x1xf32> to vector<16x32xf32>
    %207 = arith.mulf %202, %206 : vector<16x32xf32>
    %c1_110 = arith.constant 1 : index
    %c0_111 = arith.constant 0 : index
    %c0_112 = arith.constant 0 : index
    %208 = vector.load %arg12[%c1_110, %c0_111, %c0_112] : memref<2x1x32xf32, #tpu.memory_space<vmem>>, vector<1x1x32xf32>
    %209 = vector.shape_cast %208 : vector<1x1x32xf32> to vector<1x32xf32>
    %210 = vector.broadcast %209 : vector<1x32xf32> to vector<16x32xf32>
    %211 = arith.mulf %207, %210 : vector<16x32xf32>
    %c1_113 = arith.constant 1 : index
    %c0_114 = arith.constant 0 : index
    %c0_115 = arith.constant 0 : index
    %212 = vector.load %arg13[%c1_113, %c0_114, %c0_115] : memref<2x1x32xf32, #tpu.memory_space<vmem>>, vector<1x1x32xf32>
    %213 = vector.shape_cast %212 : vector<1x1x32xf32> to vector<1x32xf32>
    %214 = vector.broadcast %213 : vector<1x32xf32> to vector<16x32xf32>
    %215 = arith.addf %211, %214 : vector<16x32xf32>
    %216 = vector.shape_cast %215 : vector<16x32xf32> to vector<2x8x32xf32>
    %cst_116 = arith.constant dense<0.000000e+00> : vector<2x32xf32>
    %217 = vector.multi_reduction <add>, %216, %cst_116 [1] : vector<2x8x32xf32> to vector<2x32xf32>
    %cst_117 = arith.constant 8.000000e+00 : f32
    %218 = vector.broadcast %cst_117 : f32 to vector<2x32xf32>
    %219 = arith.divf %217, %218 : vector<2x32xf32>
    %c0_118 = arith.constant 0 : index
    %c0_119 = arith.constant 0 : index
    %220 = vector.load %arg14[%c0_118, %c0_119] : memref<2x32xf32, #tpu.memory_space<vmem>>, vector<2x32xf32>
    tpu.vector_store %arg14[%c0_118, %c0_119], %219 {strides = array<i32>} : memref<2x32xf32, #tpu.memory_space<vmem>>, vector<2x32xf32>,
    return
  }
}

</mosaic_0001>

<llo_original>
// kernel: tpu_custom_call.1
$region0: #{tpu_custom_call.1}
  #allocation0 [shape = 'u32[]', space=smem, size = 0x4, offset = 0x4, fixed_abs, tag = 'smem constant byte address 0x4 - core index']
  #allocation1 [shape = 'u32[144,128]{1,0:T(1,128)}', space=vmem, size = 0x12000, scoped, tag = 'internal scratch']
  %s0 = inlined_call_operand.hbm [shape: f32[2,8,8], index: 0, kind: input, shape index: {}]
  %s1 = inlined_call_operand.hbm [shape: f32[16,32], index: 1, kind: input, shape index: {}]
  %s2 = inlined_call_operand.vmem [shape: bf16[2,32,32], index: 2, kind: input, shape index: {}]
  %s3 = inlined_call_operand.vmem [shape: bf16[2,32,32], index: 3, kind: input, shape index: {}]
  %s4 = inlined_call_operand.vmem [shape: bf16[2,32,32], index: 4, kind: input, shape index: {}]
  %s5 = inlined_call_operand.vmem [shape: bf16[2,32,32], index: 5, kind: input, shape index: {}]
  %s6 = inlined_call_operand.vmem [shape: f32[2,1,32], index: 6, kind: input, shape index: {}]
  %s7 = inlined_call_operand.vmem [shape: f32[2,1,32], index: 7, kind: input, shape index: {}]
  %s8 = inlined_call_operand.vmem [shape: bf16[2,32,128], index: 8, kind: input, shape index: {}]
  %s9 = inlined_call_operand.vmem [shape: f32[2,1,128], index: 9, kind: input, shape index: {}]
  %s10 = inlined_call_operand.vmem [shape: bf16[2,128,32], index: 10, kind: input, shape index: {}]
  %s11 = inlined_call_operand.vmem [shape: f32[2,1,32], index: 11, kind: input, shape index: {}]
  %s12 = inlined_call_operand.vmem [shape: f32[2,1,32], index: 12, kind: input, shape index: {}]
  %s13 = inlined_call_operand.vmem [shape: f32[2,1,32], index: 13, kind: input, shape index: {}]
  %s14 = inlined_call_operand.hbm [shape: f32[2,32], index: 14, kind: output, shape index: {}]
  %s15 = sld [smem:[#allocation0]]
  $region74: #{tpu_custom_call.1} parent=0
    _
  %s17 = ssub.s32 1, %s15
  %s18 = scalar_select 0, %s17, %s15
  $region1: #{tpu_custom_call.1} parent=0
    #allocation2 [shape = 'u8[8192]{0}', space=vmem, size = 0x2000, scoped, tag = 'input window, operand 0, single buffered']
    #allocation3 [shape = 's32[1]{0}', space=sflag, size = 0x4, scoped, tag = 'scoped memory for tpu_custom_call.1']
    #allocation4 [shape = 's32[1]{0}', space=sflag, size = 0x4, scoped, tag = 'scoped memory for tpu_custom_call.1']
    #allocation5 [shape = 'u8[8192]{0}', space=vmem, size = 0x2000, scoped, tag = 'input window, operand 1, single buffered']
    #allocation6 [shape = 's32[1]{0}', space=sflag, size = 0x4, scoped, tag = 'scoped memory for tpu_custom_call.1']
    #allocation7 [shape = 'u8[1024]{0}', space=vmem, size = 0x400, scoped, tag = 'output window, operand 0, single buffered']
    %19 = vsyncpa [#allocation3], 0
    %20 = vsyncpa [#allocation6], 0
    %21 = vsyncpa [#allocation4], 0
    // Predicated region
    $region2: #{tpu_custom_call.1} parent=1 // pred_check
      _
    $region3: #{tpu_custom_call.1} parent=1 // pred_check_branch
      %23 = sbr.rel (0) target = $region5
    $region4: #{tpu_custom_call.1} parent=1 // pred_region
      %s25 = ssub.s32 256, 256
      %26 = vsyncadd [#allocation3], %s25
      %s27 = sshll.u32 [#allocation2], 4
      %s28 = int_to_ptr.vmem [resolvable:$true] %s27
      %33 = dma.hbm_to_vmem [thread:$0]  %s0, 256, %s28, [#allocation3], 128, 128, 8
    $region5: #{tpu_custom_call.1} parent=1 // pred_fallthru
      _
    // Predicated region
    $region6: #{tpu_custom_call.1} parent=1 // pred_check
      _
    $region7: #{tpu_custom_call.1} parent=1 // pred_check_branch
      %35 = sbr.rel (0) target = $region9
    $region8: #{tpu_custom_call.1} parent=1 // pred_region
      %s37 = ssub.s32 256, 256
      %38 = vsyncadd [#allocation6], %s37
      %s39 = sshll.u32 [#allocation5], 4
      %s40 = int_to_ptr.vmem [resolvable:$true] %s39
      %45 = dma.hbm_to_vmem [thread:$0]  %s1, 256, %s40, [#allocation6], 128, 128, 8
    $region9: #{tpu_custom_call.1} parent=1 // pred_fallthru
      _
    // Predicated region
    $region10: #{tpu_custom_call.1} parent=1 // pred_check
      _
    $region11: #{tpu_custom_call.1} parent=1 // pred_check_branch
      %47 = sbr.rel (0) target = $region13
    $region12: #{tpu_custom_call.1} parent=1 // pred_region
      _
    $region13: #{tpu_custom_call.1} parent=1 // pred_fallthru
      _
    // Predicated region
    $region14: #{tpu_custom_call.1} parent=1 // pred_check
      _
    $region15: #{tpu_custom_call.1} parent=1 // pred_check_branch
      %49 = sbr.rel (0) target = $region17
    $region16: #{tpu_custom_call.1} parent=1 // pred_region
      _
    $region17: #{tpu_custom_call.1} parent=1 // pred_fallthru
      _
    // Predicated region
    $region18: #{tpu_custom_call.1} parent=1 // pred_check
      _
    $region19: #{tpu_custom_call.1} parent=1 // pred_check_branch
      %51 = sbr.rel (0) target = $region21
    $region20: #{tpu_custom_call.1} parent=1 // pred_region
      _
    $region21: #{tpu_custom_call.1} parent=1 // pred_fallthru
      _
    // Predicated region
    $region22: #{tpu_custom_call.1} parent=1 // pred_check
      _
    $region23: #{tpu_custom_call.1} parent=1 // pred_check_branch
      %53 = sbr.rel (0) target = $region25
    $region24: #{tpu_custom_call.1} parent=1 // pred_region
      _
    $region25: #{tpu_custom_call.1} parent=1 // pred_fallthru
      _
    // Predicated region
    $region26: #{tpu_custom_call.1} parent=1 // pred_check
      _
    $region27: #{tpu_custom_call.1} parent=1 // pred_check_branch
      %55 = sbr.rel (0) target = $region29
    $region28: #{tpu_custom_call.1} parent=1 // pred_region
      _
    $region29: #{tpu_custom_call.1} parent=1 // pred_fallthru
      _
    // Predicated region
    $region30: #{tpu_custom_call.1} parent=1 // pred_check
      _
    $region31: #{tpu_custom_call.1} parent=1 // pred_check_branch
      %57 = sbr.rel (0) target = $region33
    $region32: #{tpu_custom_call.1} parent=1 // pred_region
      _
    $region33: #{tpu_custom_call.1} parent=1 // pred_fallthru
      _
    // Predicated region
    $region34: #{tpu_custom_call.1} parent=1 // pred_check
      _
    $region35: #{tpu_custom_call.1} parent=1 // pred_check_branch
      %59 = sbr.rel (0) target = $region37
    $region36: #{tpu_custom_call.1} parent=1 // pred_region
      _
    $region37: #{tpu_custom_call.1} parent=1 // pred_fallthru
      _
    // Predicated region
    $region38: #{tpu_custom_call.1} parent=1 // pred_check
      _
    $region39: #{tpu_custom_call.1} parent=1 // pred_check_branch
      %61 = sbr.rel (0) target = $region41
    $region40: #{tpu_custom_call.1} parent=1 // pred_region
      _
    $region41: #{tpu_custom_call.1} parent=1 // pred_fallthru
      _
    // Predicated region
    $region42: #{tpu_custom_call.1} parent=1 // pred_check
      _
    $region43: #{tpu_custom_call.1} parent=1 // pred_check_branch
      %63 = sbr.rel (0) target = $region45
    $region44: #{tpu_custom_call.1} parent=1 // pred_region
      _
    $region45: #{tpu_custom_call.1} parent=1 // pred_fallthru
      _
    // Predicated region
    $region46: #{tpu_custom_call.1} parent=1 // pred_check
      _
    $region47: #{tpu_custom_call.1} parent=1 // pred_check_branch
      %65 = sbr.rel (0) target = $region49
    $region48: #{tpu_custom_call.1} parent=1 // pred_region
      _
    $region49: #{tpu_custom_call.1} parent=1 // pred_fallthru
      _
    // Predicated region
    $region50: #{tpu_custom_call.1} parent=1 // pred_check
      _
    $region51: #{tpu_custom_call.1} parent=1 // pred_check_branch
      %67 = sbr.rel (0) target = $region53
    $region52: #{tpu_custom_call.1} parent=1 // pred_region
      _
    $region53: #{tpu_custom_call.1} parent=1 // pred_fallthru
      _
    // Predicated region
    $region54: #{tpu_custom_call.1} parent=1 // pred_check
      _
    $region55: #{tpu_custom_call.1} parent=1 // pred_check_branch
      %69 = sbr.rel (0) target = $region57
    $region56: #{tpu_custom_call.1} parent=1 // pred_region
      _
    $region57: #{tpu_custom_call.1} parent=1 // pred_fallthru
      _
    // Predicated region
    $region58: #{tpu_custom_call.1} parent=1 // pred_check
      _
    $region59: #{tpu_custom_call.1} parent=1 // pred_check_branch
      %71 = sbr.rel (0) target = $region61
    $region60: #{tpu_custom_call.1} parent=1 // pred_region
      %72 = dma.done [#allocation3], 256
    $region61: #{tpu_custom_call.1} parent=1 // pred_fallthru
      _
    // Predicated region
    $region62: #{tpu_custom_call.1} parent=1 // pred_check
      _
    $region63: #{tpu_custom_call.1} parent=1 // pred_check_branch
      %74 = sbr.rel (0) target = $region65
    $region64: #{tpu_custom_call.1} parent=1 // pred_region
      %75 = dma.done [#allocation6], 256
    $region65: #{tpu_custom_call.1} parent=1 // pred_fallthru
      _
    %v77 = vld [vmem:[#allocation5] sm:$0xff]
    %v78 = vld [vmem:[#allocation5 + $0x8] sm:$0xff]
    %v79 = vld [vmem:[#allocation2] sm:$0xff]
    %v80 = vld [vmem:[#allocation2 + $0x8] sm:$0xff]
    %v81 = vpack.c.bf16 %v78, %v77
    %v82 = vld [vmem:[%s2] sm:$0xf]
    %v83 = vld [vmem:[%s2 + $0x4] sm:$0xf]
    %v84 = vld [vmem:[%s2 + $0x8] sm:$0xf]
    %v85 = vld [vmem:[%s2 + $0xc] sm:$0xf]
    %v90 = vunpack.c.l.b16 %v82
    %v91 = vunpack.c.l.b16 %v83
    %v92 = vunpack.c.l.b16 %v84
    %v93 = vunpack.c.l.b16 %v85
    %v94 = vpack.c.b16 %v91, %v90
    %v95 = vpack.c.b16 %v93, %v92
    %vm98 = vcmask 261120
    %v100 = vsel %vm98, %v81, 0
    %102 = vmatprep.subr.bf16.mxu0 0
    %103 = vmatpush1.bf16.msra.mxu0 0
    %104 = vmatprep.subr.bf16.mxu0 0
    %105 = vmatpush1.bf16.msra.mxu0 0
    %106 = vmatprep.subr.bf16.mxu0 0
    %107 = vmatpush1.bf16.msra.mxu0 0
    %108 = vmatprep.subr.bf16.mxu0 0
    %109 = vmatpush1.bf16.msra.mxu0 0
    %110 = vmatprep.subr.bf16.mxu0 0
    %111 = vmatpush1.bf16.msra.mxu0 0
    %112 = vmatprep.subr.bf16.mxu0 0
    %113 = vmatpush1.bf16.msra.mxu0 0
    %114 = vmatprep.subr.bf16.mxu0 0
    %115 = vmatpush1.bf16.msra.mxu0 %v95
    %116 = vmatprep.subr.bf16.mxu0 0
    %117 = vmatpush1.bf16.msra.mxu0 %v94
    %118 = vmatprep.subr.bf16.mxu0 0
    %119 = vmatpush2.bf16.msra.mxu0 0
    %120 = vmatprep.subr.bf16.mxu0 0
    %121 = vmatpush2.bf16.msra.mxu0 0
    %122 = vmatprep.subr.bf16.mxu0 0
    %123 = vmatpush2.bf16.msra.mxu0 0
    %124 = vmatprep.subr.bf16.mxu0 0
    %125 = vmatpush2.bf16.msra.mxu0 0
    %126 = vmatprep.subr.bf16.mxu0 0
    %127 = vmatpush2.bf16.msra.mxu0 0
    %128 = vmatprep.subr.bf16.mxu0 0
    %129 = vmatpush2.bf16.msra.mxu0 0
    %130 = vmatprep.subr.bf16.mxu0 0
    %131 = vmatpush2.bf16.msra.mxu0 0
    %132 = vmatprep.subr.bf16.mxu0 0
    %133 = vmatpush2.bf16.msra.mxu0 0
    %134 = vmatprep.mubr.bf16.mxu0 0
    %135 = vmatmul.mubr.bf16.gmra.mxu0 %v100
    %v136 = vpop.f32.mrf.mxu0
    %v137 = vadd.f32 0.0, %v136
    %v138 = vpop.f32.mrf.mxu0
    %v139 = vpop.f32.mrf.mxu0
    %v140 = vadd.f32 0.0, %v139
    %v141 = vpop.f32.mrf.mxu0
    %142 = vdwg.mxu0
    %v143 = vld [vmem:[%s3] sm:$0xf]
    %v144 = vld [vmem:[%s3 + $0x4] sm:$0xf]
    %v145 = vld [vmem:[%s3 + $0x8] sm:$0xf]
    %v146 = vld [vmem:[%s3 + $0xc] sm:$0xf]
    %v151 = vunpack.c.l.b16 %v143
    %v152 = vunpack.c.l.b16 %v144
    %v153 = vunpack.c.l.b16 %v145
    %v154 = vunpack.c.l.b16 %v146
    %v155 = vpack.c.b16 %v152, %v151
    %v156 = vpack.c.b16 %v154, %v153
    %159 = vmatprep.subr.bf16.mxu0 0
    %160 = vmatpush1.bf16.msra.mxu0 0
    %161 = vmatprep.subr.bf16.mxu0 0
    %162 = vmatpush1.bf16.msra.mxu0 0
    %163 = vmatprep.subr.bf16.mxu0 0
    %164 = vmatpush1.bf16.msra.mxu0 0
    %165 = vmatprep.subr.bf16.mxu0 0
    %166 = vmatpush1.bf16.msra.mxu0 0
    %167 = vmatprep.subr.bf16.mxu0 0
    %168 = vmatpush1.bf16.msra.mxu0 0
    %169 = vmatprep.subr.bf16.mxu0 0
    %170 = vmatpush1.bf16.msra.mxu0 0
    %171 = vmatprep.subr.bf16.mxu0 0
    %172 = vmatpush1.bf16.msra.mxu0 %v156
    %173 = vmatprep.subr.bf16.mxu0 0
    %174 = vmatpush1.bf16.msra.mxu0 %v155
    %175 = vmatprep.subr.bf16.mxu0 0
    %176 = vmatpush2.bf16.msra.mxu0 0
    %177 = vmatprep.subr.bf16.mxu0 0
    %178 = vmatpush2.bf16.msra.mxu0 0
    %179 = vmatprep.subr.bf16.mxu0 0
    %180 = vmatpush2.bf16.msra.mxu0 0
    %181 = vmatprep.subr.bf16.mxu0 0
    %182 = vmatpush2.bf16.msra.mxu0 0
    %183 = vmatprep.subr.bf16.mxu0 0
    %184 = vmatpush2.bf16.msra.mxu0 0
    %185 = vmatprep.subr.bf16.mxu0 0
    %186 = vmatpush2.bf16.msra.mxu0 0
    %187 = vmatprep.subr.bf16.mxu0 0
    %188 = vmatpush2.bf16.msra.mxu0 0
    %189 = vmatprep.subr.bf16.mxu0 0
    %190 = vmatpush2.bf16.msra.mxu0 0
    %191 = vmatprep.mubr.bf16.mxu0 0
    %192 = vmatmul.mubr.bf16.gmra.mxu0 %v100
    %v193 = vpop.f32.mrf.mxu0
    %v194 = vadd.f32 0.0, %v193
    %v195 = vpop.f32.mrf.mxu0
    %v196 = vpop.f32.mrf.mxu0
    %v197 = vadd.f32 0.0, %v196
    %v198 = vpop.f32.mrf.mxu0
    %199 = vdwg.mxu0
    %v200 = vld [vmem:[%s4] sm:$0xf]
    %v201 = vld [vmem:[%s4 + $0x4] sm:$0xf]
    %v202 = vld [vmem:[%s4 + $0x8] sm:$0xf]
    %v203 = vld [vmem:[%s4 + $0xc] sm:$0xf]
    %v208 = vunpack.c.l.b16 %v200
    %v209 = vunpack.c.l.b16 %v201
    %v210 = vunpack.c.l.b16 %v202
    %v211 = vunpack.c.l.b16 %v203
    %v212 = vpack.c.b16 %v209, %v208
    %v213 = vpack.c.b16 %v211, %v210
    %216 = vmatprep.subr.bf16.mxu0 0
    %217 = vmatpush1.bf16.msra.mxu0 0
    %218 = vmatprep.subr.bf16.mxu0 0
    %219 = vmatpush1.bf16.msra.mxu0 0
    %220 = vmatprep.subr.bf16.mxu0 0
    %221 = vmatpush1.bf16.msra.mxu0 0
    %222 = vmatprep.subr.bf16.mxu0 0
    %223 = vmatpush1.bf16.msra.mxu0 0
    %224 = vmatprep.subr.bf16.mxu0 0
    %225 = vmatpush1.bf16.msra.mxu0 0
    %226 = vmatprep.subr.bf16.mxu0 0
    %227 = vmatpush1.bf16.msra.mxu0 0
    %228 = vmatprep.subr.bf16.mxu0 0
    %229 = vmatpush1.bf16.msra.mxu0 %v213
    %230 = vmatprep.subr.bf16.mxu0 0
    %231 = vmatpush1.bf16.msra.mxu0 %v212
    %232 = vmatprep.subr.bf16.mxu0 0
    %233 = vmatpush2.bf16.msra.mxu0 0
    %234 = vmatprep.subr.bf16.mxu0 0
    %235 = vmatpush2.bf16.msra.mxu0 0
    %236 = vmatprep.subr.bf16.mxu0 0
    %237 = vmatpush2.bf16.msra.mxu0 0
    %238 = vmatprep.subr.bf16.mxu0 0
    %239 = vmatpush2.bf16.msra.mxu0 0
    %240 = vmatprep.subr.bf16.mxu0 0
    %241 = vmatpush2.bf16.msra.mxu0 0
    %242 = vmatprep.subr.bf16.mxu0 0
    %243 = vmatpush2.bf16.msra.mxu0 0
    %244 = vmatprep.subr.bf16.mxu0 0
    %245 = vmatpush2.bf16.msra.mxu0 0
    %246 = vmatprep.subr.bf16.mxu0 0
    %247 = vmatpush2.bf16.msra.mxu0 0
    %248 = vmatprep.mubr.bf16.mxu0 0
    %249 = vmatmul.mubr.bf16.gmra.mxu0 %v100
    %v250 = vpop.f32.mrf.mxu0
    %v251 = vadd.f32 0.0, %v250
    %v252 = vpop.f32.mrf.mxu0
    %v253 = vpop.f32.mrf.mxu0
    %v254 = vadd.f32 0.0, %v253
    %v255 = vpop.f32.mrf.mxu0
    %256 = vdwg.mxu0
    %v257 = vpack.c.bf16 %v137, %v137
    %v258 = vpack.c.bf16 %v140, %v140
    %v259 = vpack.c.bf16 %v194, %v194
    %v260 = vpack.c.bf16 %v197, %v197
    %v261 = vpack.c.bf16 %v251, %v251
    %v262 = vpack.c.bf16 %v254, %v254
    %v264 = vsel %vm98, %v257, 0
    %v267 = vsel %vm98, %v259, 0
    %269 = vmatprep.subr.bf16.mxu0 0
    %270 = vmatpush1.bf16.xpose.msra.mxu0 0
    %271 = vmatprep.subr.bf16.mxu0 0
    %272 = vmatpush1.bf16.xpose.msra.mxu0 0
    %273 = vmatprep.subr.bf16.mxu0 0
    %274 = vmatpush1.bf16.xpose.msra.mxu0 0
    %275 = vmatprep.subr.bf16.mxu0 0
    %276 = vmatpush1.bf16.xpose.msra.mxu0 0
    %277 = vmatprep.subr.bf16.mxu0 0
    %278 = vmatpush1.bf16.xpose.msra.mxu0 0
    %279 = vmatprep.subr.bf16.mxu0 0
    %280 = vmatpush1.bf16.xpose.msra.mxu0 0
    %281 = vmatprep.subr.bf16.mxu0 0
    %282 = vmatpush1.bf16.xpose.msra.mxu0 0
    %283 = vmatprep.subr.bf16.mxu0 0
    %284 = vmatpush1.bf16.xpose.msra.mxu0 %v267
    %285 = vmatprep.subr.bf16.mxu0 0
    %286 = vmatpush2.bf16.xpose.msra.mxu0 0
    %287 = vmatprep.subr.bf16.mxu0 0
    %288 = vmatpush2.bf16.xpose.msra.mxu0 0
    %289 = vmatprep.subr.bf16.mxu0 0
    %290 = vmatpush2.bf16.xpose.msra.mxu0 0
    %291 = vmatprep.subr.bf16.mxu0 0
    %292 = vmatpush2.bf16.xpose.msra.mxu0 0
    %293 = vmatprep.subr.bf16.mxu0 0
    %294 = vmatpush2.bf16.xpose.msra.mxu0 0
    %295 = vmatprep.subr.bf16.mxu0 0
    %296 = vmatpush2.bf16.xpose.msra.mxu0 0
    %297 = vmatprep.subr.bf16.mxu0 0
    %298 = vmatpush2.bf16.xpose.msra.mxu0 0
    %299 = vmatprep.subr.bf16.mxu0 0
    %300 = vmatpush2.bf16.xpose.msra.mxu0 0
    %301 = vmatprep.mubr.bf16.mxu0 0
    %302 = vmatmul.mubr.bf16.gmra.mxu0 %v264
    %v303 = vpop.f32.mrf.mxu0
    %v304 = vadd.f32 %v79, %v303
    %v305 = vpop.f32.mrf.mxu0
    %v306 = vpop.f32.mrf.mxu0
    %v307 = vpop.f32.mrf.mxu0
    %308 = vdwg.mxu0
    %v310 = vsel %vm98, %v258, 0
    %v313 = vsel %vm98, %v260, 0
    %315 = vmatprep.subr.bf16.mxu0 0
    %316 = vmatpush1.bf16.xpose.msra.mxu0 0
    %317 = vmatprep.subr.bf16.mxu0 0
    %318 = vmatpush1.bf16.xpose.msra.mxu0 0
    %319 = vmatprep.subr.bf16.mxu0 0
    %320 = vmatpush1.bf16.xpose.msra.mxu0 0
    %321 = vmatprep.subr.bf16.mxu0 0
    %322 = vmatpush1.bf16.xpose.msra.mxu0 0
    %323 = vmatprep.subr.bf16.mxu0 0
    %324 = vmatpush1.bf16.xpose.msra.mxu0 0
    %325 = vmatprep.subr.bf16.mxu0 0
    %326 = vmatpush1.bf16.xpose.msra.mxu0 0
    %327 = vmatprep.subr.bf16.mxu0 0
    %328 = vmatpush1.bf16.xpose.msra.mxu0 0
    %329 = vmatprep.subr.bf16.mxu0 0
    %330 = vmatpush1.bf16.xpose.msra.mxu0 %v313
    %331 = vmatprep.subr.bf16.mxu0 0
    %332 = vmatpush2.bf16.xpose.msra.mxu0 0
    %333 = vmatprep.subr.bf16.mxu0 0
    %334 = vmatpush2.bf16.xpose.msra.mxu0 0
    %335 = vmatprep.subr.bf16.mxu0 0
    %336 = vmatpush2.bf16.xpose.msra.mxu0 0
    %337 = vmatprep.subr.bf16.mxu0 0
    %338 = vmatpush2.bf16.xpose.msra.mxu0 0
    %339 = vmatprep.subr.bf16.mxu0 0
    %340 = vmatpush2.bf16.xpose.msra.mxu0 0
    %341 = vmatprep.subr.bf16.mxu0 0
    %342 = vmatpush2.bf16.xpose.msra.mxu0 0
    %343 = vmatprep.subr.bf16.mxu0 0
    %344 = vmatpush2.bf16.xpose.msra.mxu0 0
    %345 = vmatprep.subr.bf16.mxu0 0
    %346 = vmatpush2.bf16.xpose.msra.mxu0 0
    %347 = vmatprep.mubr.bf16.mxu0 0
    %348 = vmatmul.mubr.bf16.gmra.mxu0 %v310
    %v349 = vpop.f32.mrf.mxu0
    %v350 = vadd.f32 %v80, %v349
    %v351 = vpop.f32.mrf.mxu0
    %v352 = vpop.f32.mrf.mxu0
    %v353 = vpop.f32.mrf.mxu0
    %354 = vdwg.mxu0
    %vm355 = vcmask 64512
    %v356 = vsel %vm355, %v304, -inf
    %357 = vmax.xlane.f32.xlu0 %v356
    %v358 = vpop.xlane.xlu0 %357
    %v359 = vsel %vm355, %v350, -inf
    %360 = vmax.xlane.f32.xlu0 %v359
    %v361 = vpop.xlane.xlu0 %360
    %v362 = vsub.f32 %v304, %v358
    %v363 = vsub.f32 %v350, %v361
    %v364 = vmul.f32 %v362, 1.442695
    %v365 = vpow.pop %v364
    %v366 = vmul.f32 %v363, 1.442695
    %v367 = vpow.pop %v366
    %v368 = vsel %vm355, %v365, 0.0
    %369 = vadd.xlane.f32.xlu0 %v368
    %v370 = vpop.xlane.xlu0 %369
    %v371 = vsel %vm355, %v367, 0.0
    %372 = vadd.xlane.f32.xlu0 %v371
    %v373 = vpop.xlane.xlu0 %372
    %v374 = vrcp.pop %v370
    %v375 = vrcp.pop %v373
    %v376 = vmul.f32 %v365, %v374
    %v377 = vmul.f32 %v367, %v375
    %v378 = vpack.c.bf16 %v376, %v376
    %v379 = vpack.c.bf16 %v377, %v377
    %v381 = vsel %vm355, %v378, 0
    %vm383 = vcmask 1043456
    %v385 = vsel %vm383, %v261, 0
    %387 = vmatprep.subr.bf16.mxu0 0
    %388 = vmatpush1.bf16.msra.mxu0 0
    %389 = vmatprep.subr.bf16.mxu0 0
    %390 = vmatpush1.bf16.msra.mxu0 0
    %391 = vmatprep.subr.bf16.mxu0 0
    %392 = vmatpush1.bf16.msra.mxu0 0
    %393 = vmatprep.subr.bf16.mxu0 0
    %394 = vmatpush1.bf16.msra.mxu0 0
    %395 = vmatprep.subr.bf16.mxu0 0
    %396 = vmatpush1.bf16.msra.mxu0 0
    %397 = vmatprep.subr.bf16.mxu0 0
    %398 = vmatpush1.bf16.msra.mxu0 0
    %399 = vmatprep.subr.bf16.mxu0 0
    %400 = vmatpush1.bf16.msra.mxu0 0
    %401 = vmatprep.subr.bf16.mxu0 0
    %402 = vmatpush1.bf16.msra.mxu0 %v385
    %403 = vmatprep.subr.bf16.mxu0 0
    %404 = vmatpush2.bf16.msra.mxu0 0
    %405 = vmatprep.subr.bf16.mxu0 0
    %406 = vmatpush2.bf16.msra.mxu0 0
    %407 = vmatprep.subr.bf16.mxu0 0
    %408 = vmatpush2.bf16.msra.mxu0 0
    %409 = vmatprep.subr.bf16.mxu0 0
    %410 = vmatpush2.bf16.msra.mxu0 0
    %411 = vmatprep.subr.bf16.mxu0 0
    %412 = vmatpush2.bf16.msra.mxu0 0
    %413 = vmatprep.subr.bf16.mxu0 0
    %414 = vmatpush2.bf16.msra.mxu0 0
    %415 = vmatprep.subr.bf16.mxu0 0
    %416 = vmatpush2.bf16.msra.mxu0 0
    %417 = vmatprep.subr.bf16.mxu0 0
    %418 = vmatpush2.bf16.msra.mxu0 0
    %419 = vmatprep.mubr.bf16.mxu0 0
    %420 = vmatmul.mubr.bf16.gmra.mxu0 %v381
    %v421 = vpop.f32.mrf.mxu0
    %v422 = vadd.f32 0.0, %v421
    %v423 = vpop.f32.mrf.mxu0
    %v424 = vpop.f32.mrf.mxu0
    %v425 = vpop.f32.mrf.mxu0
    %426 = vdwg.mxu0
    %v428 = vsel %vm355, %v379, 0
    %v431 = vsel %vm383, %v262, 0
    %433 = vmatprep.subr.bf16.mxu0 0
    %434 = vmatpush1.bf16.msra.mxu0 0
    %435 = vmatprep.subr.bf16.mxu0 0
    %436 = vmatpush1.bf16.msra.mxu0 0
    %437 = vmatprep.subr.bf16.mxu0 0
    %438 = vmatpush1.bf16.msra.mxu0 0
    %439 = vmatprep.subr.bf16.mxu0 0
    %440 = vmatpush1.bf16.msra.mxu0 0
    %441 = vmatprep.subr.bf16.mxu0 0
    %442 = vmatpush1.bf16.msra.mxu0 0
    %443 = vmatprep.subr.bf16.mxu0 0
    %444 = vmatpush1.bf16.msra.mxu0 0
    %445 = vmatprep.subr.bf16.mxu0 0
    %446 = vmatpush1.bf16.msra.mxu0 0
    %447 = vmatprep.subr.bf16.mxu0 0
    %448 = vmatpush1.bf16.msra.mxu0 %v431
    %449 = vmatprep.subr.bf16.mxu0 0
    %450 = vmatpush2.bf16.msra.mxu0 0
    %451 = vmatprep.subr.bf16.mxu0 0
    %452 = vmatpush2.bf16.msra.mxu0 0
    %453 = vmatprep.subr.bf16.mxu0 0
    %454 = vmatpush2.bf16.msra.mxu0 0
    %455 = vmatprep.subr.bf16.mxu0 0
    %456 = vmatpush2.bf16.msra.mxu0 0
    %457 = vmatprep.subr.bf16.mxu0 0
    %458 = vmatpush2.bf16.msra.mxu0 0
    %459 = vmatprep.subr.bf16.mxu0 0
    %460 = vmatpush2.bf16.msra.mxu0 0
    %461 = vmatprep.subr.bf16.mxu0 0
    %462 = vmatpush2.bf16.msra.mxu0 0
    %463 = vmatprep.subr.bf16.mxu0 0
    %464 = vmatpush2.bf16.msra.mxu0 0
    %465 = vmatprep.mubr.bf16.mxu0 0
    %466 = vmatmul.mubr.bf16.gmra.mxu0 %v428
    %v467 = vpop.f32.mrf.mxu0
    %v468 = vadd.f32 0.0, %v467
    %v469 = vpop.f32.mrf.mxu0
    %v470 = vpop.f32.mrf.mxu0
    %v471 = vpop.f32.mrf.mxu0
    %472 = vdwg.mxu0
    %v473 = vpack.c.bf16 %v468, %v422
    %v474 = vld [vmem:[%s5] sm:$0xf]
    %v475 = vld [vmem:[%s5 + $0x4] sm:$0xf]
    %v476 = vld [vmem:[%s5 + $0x8] sm:$0xf]
    %v477 = vld [vmem:[%s5 + $0xc] sm:$0xf]
    %v482 = vunpack.c.l.b16 %v474
    %v483 = vunpack.c.l.b16 %v475
    %v484 = vunpack.c.l.b16 %v476
    %v485 = vunpack.c.l.b16 %v477
    %v486 = vpack.c.b16 %v483, %v482
    %v487 = vpack.c.b16 %v485, %v484
    %v491 = vsel %vm98, %v473, 0
    %493 = vmatprep.subr.bf16.mxu0 0
    %494 = vmatpush1.bf16.msra.mxu0 0
    %495 = vmatprep.subr.bf16.mxu0 0
    %496 = vmatpush1.bf16.msra.mxu0 0
    %497 = vmatprep.subr.bf16.mxu0 0
    %498 = vmatpush1.bf16.msra.mxu0 0
    %499 = vmatprep.subr.bf16.mxu0 0
    %500 = vmatpush1.bf16.msra.mxu0 0
    %501 = vmatprep.subr.bf16.mxu0 0
    %502 = vmatpush1.bf16.msra.mxu0 0
    %503 = vmatprep.subr.bf16.mxu0 0
    %504 = vmatpush1.bf16.msra.mxu0 0
    %505 = vmatprep.subr.bf16.mxu0 0
    %506 = vmatpush1.bf16.msra.mxu0 %v487
    %507 = vmatprep.subr.bf16.mxu0 0
    %508 = vmatpush1.bf16.msra.mxu0 %v486
    %509 = vmatprep.subr.bf16.mxu0 0
    %510 = vmatpush2.bf16.msra.mxu0 0
    %511 = vmatprep.subr.bf16.mxu0 0
    %512 = vmatpush2.bf16.msra.mxu0 0
    %513 = vmatprep.subr.bf16.mxu0 0
    %514 = vmatpush2.bf16.msra.mxu0 0
    %515 = vmatprep.subr.bf16.mxu0 0
    %516 = vmatpush2.bf16.msra.mxu0 0
    %517 = vmatprep.subr.bf16.mxu0 0
    %518 = vmatpush2.bf16.msra.mxu0 0
    %519 = vmatprep.subr.bf16.mxu0 0
    %520 = vmatpush2.bf16.msra.mxu0 0
    %521 = vmatprep.subr.bf16.mxu0 0
    %522 = vmatpush2.bf16.msra.mxu0 0
    %523 = vmatprep.subr.bf16.mxu0 0
    %524 = vmatpush2.bf16.msra.mxu0 0
    %525 = vmatprep.mubr.bf16.mxu0 0
    %526 = vmatmul.mubr.bf16.gmra.mxu0 %v491
    %v527 = vpop.f32.mrf.mxu0
    %v528 = vadd.f32 0.0, %v527
    %v529 = vpop.f32.mrf.mxu0
    %v530 = vpop.f32.mrf.mxu0
    %v531 = vadd.f32 0.0, %v530
    %v532 = vpop.f32.mrf.mxu0
    %533 = vdwg.mxu0
    %v534 = vadd.f32 %v77, %v528
    %v535 = vadd.f32 %v78, %v531
    %v536 = vsel %vm98, %v534, 0.0
    %537 = vadd.xlane.f32.xlu0 %v536
    %v538 = vpop.xlane.xlu0 %537
    %v539 = vsel %vm98, %v535, 0.0
    %540 = vadd.xlane.f32.xlu0 %v539
    %v541 = vpop.xlane.xlu0 %540
    %v542 = vrcp.pop 32.0
    %v543 = vmul.f32 %v538, %v542
    %v544 = vmul.f32 %v541, %v542
    %v545 = vsub.f32 %v534, %v543
    %v546 = vsub.f32 %v535, %v544
    %v547 = vmul.f32 %v545, %v545
    %v548 = vmul.f32 %v546, %v546
    %v549 = vsel %vm98, %v547, 0.0
    %550 = vadd.xlane.f32.xlu0 %v549
    %v551 = vpop.xlane.xlu0 %550
    %v552 = vsel %vm98, %v548, 0.0
    %553 = vadd.xlane.f32.xlu0 %v552
    %v554 = vpop.xlane.xlu0 %553
    %v555 = vmul.f32 %v551, %v542
    %v556 = vmul.f32 %v554, %v542
    %v557 = vadd.f32 %v555, 1e-05
    %v558 = vadd.f32 %v556, 1e-05
    %v559 = vrsqrt.pop %v557
    %v560 = vrsqrt.pop %v558
    %v561 = vmul.f32 %v545, %v559
    %v562 = vmul.f32 %v546, %v560
    %v563 = vld [vmem:[%s6] sm:$0x1]
    %v565 = vlaneseq
    %v566 = vshrl.u32 %v565, 7
    %v567 = vsub.s32 0, %v566
    %v568 = vrot.slane %v563, %v567
    %v570 = vmul.f32 %v561, %v568
    %v571 = vmul.f32 %v562, %v568
    %v572 = vld [vmem:[%s7] sm:$0x1]
    %v574 = vlaneseq
    %v575 = vshrl.u32 %v574, 7
    %v576 = vsub.s32 0, %v575
    %v577 = vrot.slane %v572, %v576
    %v579 = vadd.f32 %v570, %v577
    %v580 = vadd.f32 %v571, %v577
    %v581 = vpack.c.bf16 %v580, %v579
    %v582 = vld [vmem:[%s8] sm:$0xf]
    %v583 = vld [vmem:[%s8 + $0x4] sm:$0xf]
    %v584 = vld [vmem:[%s8 + $0x8] sm:$0xf]
    %v585 = vld [vmem:[%s8 + $0xc] sm:$0xf]
    %v586 = vld [vmem:[%s9] sm:$0x1]
    %v588 = vlaneseq
    %v589 = vshrl.u32 %v588, 7
    %v590 = vsub.s32 0, %v589
    %v591 = vrot.slane %v586, %v590
    %v597 = vunpack.c.l.b16 %v582
    %v598 = vunpack.c.l.b16 %v583
    %v599 = vunpack.c.l.b16 %v584
    %v600 = vunpack.c.l.b16 %v585
    %v601 = vpack.c.b16 %v598, %v597
    %v602 = vpack.c.b16 %v600, %v599
    %v606 = vsel %vm98, %v581, 0
    %608 = vmatprep.subr.bf16.mxu0 0
    %609 = vmatpush1.bf16.msra.mxu0 0
    %610 = vmatprep.subr.bf16.mxu0 0
    %611 = vmatpush1.bf16.msra.mxu0 0
    %612 = vmatprep.subr.bf16.mxu0 0
    %613 = vmatpush1.bf16.msra.mxu0 0
    %614 = vmatprep.subr.bf16.mxu0 0
    %615 = vmatpush1.bf16.msra.mxu0 0
    %616 = vmatprep.subr.bf16.mxu0 0
    %617 = vmatpush1.bf16.msra.mxu0 0
    %618 = vmatprep.subr.bf16.mxu0 0
    %619 = vmatpush1.bf16.msra.mxu0 0
    %620 = vmatprep.subr.bf16.mxu0 0
    %621 = vmatpush1.bf16.msra.mxu0 %v602
    %622 = vmatprep.subr.bf16.mxu0 0
    %623 = vmatpush1.bf16.msra.mxu0 %v601
    %624 = vmatprep.subr.bf16.mxu0 0
    %625 = vmatpush2.bf16.msra.mxu0 0
    %626 = vmatprep.subr.bf16.mxu0 0
    %627 = vmatpush2.bf16.msra.mxu0 0
    %628 = vmatprep.subr.bf16.mxu0 0
    %629 = vmatpush2.bf16.msra.mxu0 0
    %630 = vmatprep.subr.bf16.mxu0 0
    %631 = vmatpush2.bf16.msra.mxu0 0
    %632 = vmatprep.subr.bf16.mxu0 0
    %633 = vmatpush2.bf16.msra.mxu0 0
    %634 = vmatprep.subr.bf16.mxu0 0
    %635 = vmatpush2.bf16.msra.mxu0 0
    %636 = vmatprep.subr.bf16.mxu0 0
    %637 = vmatpush2.bf16.msra.mxu0 0
    %638 = vmatprep.subr.bf16.mxu0 0
    %639 = vmatpush2.bf16.msra.mxu0 0
    %640 = vmatprep.mubr.bf16.mxu0 0
    %641 = vmatmul.mubr.bf16.gmra.mxu0 %v606
    %v642 = vpop.f32.mrf.mxu0
    %v643 = vadd.f32 %v591, %v642
    %v644 = vpop.f32.mrf.mxu0
    %v645 = vpop.f32.mrf.mxu0
    %v646 = vadd.f32 %v591, %v645
    %v647 = vpop.f32.mrf.mxu0
    %648 = vdwg.mxu0
    %v649 = vmax.f32 %v643, 0.0
    %v650 = vmax.f32 %v646, 0.0
    %v651 = vpack.c.bf16 %v650, %v649
    %v652 = vld [vmem:[%s10] sm:$0xf]
    %v653 = vld [vmem:[%s10 + $0x4] sm:$0xf]
    %v654 = vld [vmem:[%s10 + $0x8] sm:$0xf]
    %v655 = vld [vmem:[%s10 + $0xc] sm:$0xf]
    %v656 = vld [vmem:[%s10 + $0x10] sm:$0xf]
    %v657 = vld [vmem:[%s10 + $0x14] sm:$0xf]
    %v658 = vld [vmem:[%s10 + $0x18] sm:$0xf]
    %v659 = vld [vmem:[%s10 + $0x1c] sm:$0xf]
    %v660 = vld [vmem:[%s10 + $0x20] sm:$0xf]
    %v661 = vld [vmem:[%s10 + $0x24] sm:$0xf]
    %v662 = vld [vmem:[%s10 + $0x28] sm:$0xf]
    %v663 = vld [vmem:[%s10 + $0x2c] sm:$0xf]
    %v664 = vld [vmem:[%s10 + $0x30] sm:$0xf]
    %v665 = vld [vmem:[%s10 + $0x34] sm:$0xf]
    %v666 = vld [vmem:[%s10 + $0x38] sm:$0xf]
    %v667 = vld [vmem:[%s10 + $0x3c] sm:$0xf]
    %v668 = vld [vmem:[%s11] sm:$0x1]
    %v670 = vlaneseq
    %v671 = vshrl.u32 %v670, 7
    %v672 = vsub.s32 0, %v671
    %v673 = vrot.slane %v668, %v672
    %v691 = vunpack.c.l.b16 %v652
    %v692 = vunpack.c.l.b16 %v653
    %v693 = vunpack.c.l.b16 %v654
    %v694 = vunpack.c.l.b16 %v655
    %v695 = vunpack.c.l.b16 %v656
    %v696 = vunpack.c.l.b16 %v657
    %v697 = vunpack.c.l.b16 %v658
    %v698 = vunpack.c.l.b16 %v659
    %v699 = vunpack.c.l.b16 %v660
    %v700 = vunpack.c.l.b16 %v661
    %v701 = vunpack.c.l.b16 %v662
    %v702 = vunpack.c.l.b16 %v663
    %v703 = vunpack.c.l.b16 %v664
    %v704 = vunpack.c.l.b16 %v665
    %v705 = vunpack.c.l.b16 %v666
    %v706 = vunpack.c.l.b16 %v667
    %v707 = vpack.c.b16 %v692, %v691
    %v708 = vpack.c.b16 %v694, %v693
    %v709 = vpack.c.b16 %v696, %v695
    %v710 = vpack.c.b16 %v698, %v697
    %v711 = vpack.c.b16 %v700, %v699
    %v712 = vpack.c.b16 %v702, %v701
    %v713 = vpack.c.b16 %v704, %v703
    %v714 = vpack.c.b16 %v706, %v705
    %723 = vmatprep.subr.bf16.mxu0 0
    %724 = vmatpush1.bf16.msra.mxu0 %v714
    %725 = vmatprep.subr.bf16.mxu0 0
    %726 = vmatpush1.bf16.msra.mxu0 %v713
    %727 = vmatprep.subr.bf16.mxu0 0
    %728 = vmatpush1.bf16.msra.mxu0 %v712
    %729 = vmatprep.subr.bf16.mxu0 0
    %730 = vmatpush1.bf16.msra.mxu0 %v711
    %731 = vmatprep.subr.bf16.mxu0 0
    %732 = vmatpush1.bf16.msra.mxu0 %v710
    %733 = vmatprep.subr.bf16.mxu0 0
    %734 = vmatpush1.bf16.msra.mxu0 %v709
    %735 = vmatprep.subr.bf16.mxu0 0
    %736 = vmatpush1.bf16.msra.mxu0 %v708
    %737 = vmatprep.subr.bf16.mxu0 0
    %738 = vmatpush1.bf16.msra.mxu0 %v707
    %739 = vmatprep.subr.bf16.mxu0 0
    %740 = vmatpush2.bf16.msra.mxu0 0
    %741 = vmatprep.subr.bf16.mxu0 0
    %742 = vmatpush2.bf16.msra.mxu0 0
    %743 = vmatprep.subr.bf16.mxu0 0
    %744 = vmatpush2.bf16.msra.mxu0 0
    %745 = vmatprep.subr.bf16.mxu0 0
    %746 = vmatpush2.bf16.msra.mxu0 0
    %747 = vmatprep.subr.bf16.mxu0 0
    %748 = vmatpush2.bf16.msra.mxu0 0
    %749 = vmatprep.subr.bf16.mxu0 0
    %750 = vmatpush2.bf16.msra.mxu0 0
    %751 = vmatprep.subr.bf16.mxu0 0
    %752 = vmatpush2.bf16.msra.mxu0 0
    %753 = vmatprep.subr.bf16.mxu0 0
    %754 = vmatpush2.bf16.msra.mxu0 0
    %755 = vmatprep.mubr.bf16.mxu0 0
    %756 = vmatmul.mubr.bf16.gmra.mxu0 %v651
    %v757 = vpop.f32.mrf.mxu0
    %v758 = vadd.f32 %v673, %v757
    %v759 = vpop.f32.mrf.mxu0
    %v760 = vpop.f32.mrf.mxu0
    %v761 = vadd.f32 %v673, %v760
    %v762 = vpop.f32.mrf.mxu0
    %763 = vdwg.mxu0
    %v764 = vadd.f32 %v579, %v758
    %v765 = vadd.f32 %v580, %v761
    %v766 = vsel %vm98, %v764, 0.0
    %767 = vadd.xlane.f32.xlu0 %v766
    %v768 = vpop.xlane.xlu0 %767
    %v769 = vsel %vm98, %v765, 0.0
    %770 = vadd.xlane.f32.xlu0 %v769
    %v771 = vpop.xlane.xlu0 %770
    %v772 = vmul.f32 %v768, %v542
    %v773 = vmul.f32 %v771, %v542
    %v774 = vsub.f32 %v764, %v772
    %v775 = vsub.f32 %v765, %v773
    %v776 = vmul.f32 %v774, %v774
    %v777 = vmul.f32 %v775, %v775
    %v778 = vsel %vm98, %v776, 0.0
    %779 = vadd.xlane.f32.xlu0 %v778
    %v780 = vpop.xlane.xlu0 %779
    %v781 = vsel %vm98, %v777, 0.0
    %782 = vadd.xlane.f32.xlu0 %v781
    %v783 = vpop.xlane.xlu0 %782
    %v784 = vmul.f32 %v780, %v542
    %v785 = vmul.f32 %v783, %v542
    %v786 = vadd.f32 %v784, 1e-05
    %v787 = vadd.f32 %v785, 1e-05
    %v788 = vrsqrt.pop %v786
    %v789 = vrsqrt.pop %v787
    %v790 = vmul.f32 %v774, %v788
    %v791 = vmul.f32 %v775, %v789
    %v792 = vld [vmem:[%s12] sm:$0x1]
    %v794 = vlaneseq
    %v795 = vshrl.u32 %v794, 7
    %v796 = vsub.s32 0, %v795
    %v797 = vrot.slane %v792, %v796
    %v799 = vmul.f32 %v790, %v797
    %v800 = vmul.f32 %v791, %v797
    %v801 = vld [vmem:[%s13] sm:$0x1]
    %v803 = vlaneseq
    %v804 = vshrl.u32 %v803, 7
    %v805 = vsub.s32 0, %v804
    %v806 = vrot.slane %v801, %v805
    %v808 = vadd.f32 %v799, %v806
    %v809 = vadd.f32 %v800, %v806
    %v810 = vpack.c.bf16 %v809, %v808
    %s811 = scalar_lea.vmem %s2, 16
    %v812 = vld [vmem:[%s811] sm:$0xf]
    %v813 = vld [vmem:[%s811 + $0x4] sm:$0xf]
    %v814 = vld [vmem:[%s811 + $0x8] sm:$0xf]
    %v815 = vld [vmem:[%s811 + $0xc] sm:$0xf]
    %v820 = vunpack.c.l.b16 %v812
    %v821 = vunpack.c.l.b16 %v813
    %v822 = vunpack.c.l.b16 %v814
    %v823 = vunpack.c.l.b16 %v815
    %v824 = vpack.c.b16 %v821, %v820
    %v825 = vpack.c.b16 %v823, %v822
    %v829 = vsel %vm98, %v810, 0
    %831 = vmatprep.subr.bf16.mxu0 0
    %832 = vmatpush1.bf16.msra.mxu0 0
    %833 = vmatprep.subr.bf16.mxu0 0
    %834 = vmatpush1.bf16.msra.mxu0 0
    %835 = vmatprep.subr.bf16.mxu0 0
    %836 = vmatpush1.bf16.msra.mxu0 0
    %837 = vmatprep.subr.bf16.mxu0 0
    %838 = vmatpush1.bf16.msra.mxu0 0
    %839 = vmatprep.subr.bf16.mxu0 0
    %840 = vmatpush1.bf16.msra.mxu0 0
    %841 = vmatprep.subr.bf16.mxu0 0
    %842 = vmatpush1.bf16.msra.mxu0 0
    %843 = vmatprep.subr.bf16.mxu0 0
    %844 = vmatpush1.bf16.msra.mxu0 %v825
    %845 = vmatprep.subr.bf16.mxu0 0
    %846 = vmatpush1.bf16.msra.mxu0 %v824
    %847 = vmatprep.subr.bf16.mxu0 0
    %848 = vmatpush2.bf16.msra.mxu0 0
    %849 = vmatprep.subr.bf16.mxu0 0
    %850 = vmatpush2.bf16.msra.mxu0 0
    %851 = vmatprep.subr.bf16.mxu0 0
    %852 = vmatpush2.bf16.msra.mxu0 0
    %853 = vmatprep.subr.bf16.mxu0 0
    %854 = vmatpush2.bf16.msra.mxu0 0
    %855 = vmatprep.subr.bf16.mxu0 0
    %856 = vmatpush2.bf16.msra.mxu0 0
    %857 = vmatprep.subr.bf16.mxu0 0
    %858 = vmatpush2.bf16.msra.mxu0 0
    %859 = vmatprep.subr.bf16.mxu0 0
    %860 = vmatpush2.bf16.msra.mxu0 0
    %861 = vmatprep.subr.bf16.mxu0 0
    %862 = vmatpush2.bf16.msra.mxu0 0
    %863 = vmatprep.mubr.bf16.mxu0 0
    %864 = vmatmul.mubr.bf16.gmra.mxu0 %v829
    %v865 = vpop.f32.mrf.mxu0
    %v866 = vadd.f32 0.0, %v865
    %v867 = vpop.f32.mrf.mxu0
    %v868 = vpop.f32.mrf.mxu0
    %v869 = vadd.f32 0.0, %v868
    %v870 = vpop.f32.mrf.mxu0
    %871 = vdwg.mxu0
    %s872 = scalar_lea.vmem %s3, 16
    %v873 = vld [vmem:[%s872] sm:$0xf]
    %v874 = vld [vmem:[%s872 + $0x4] sm:$0xf]
    %v875 = vld [vmem:[%s872 + $0x8] sm:$0xf]
    %v876 = vld [vmem:[%s872 + $0xc] sm:$0xf]
    %v881 = vunpack.c.l.b16 %v873
    %v882 = vunpack.c.l.b16 %v874
    %v883 = vunpack.c.l.b16 %v875
    %v884 = vunpack.c.l.b16 %v876
    %v885 = vpack.c.b16 %v882, %v881
    %v886 = vpack.c.b16 %v884, %v883
    %889 = vmatprep.subr.bf16.mxu0 0
    %890 = vmatpush1.bf16.msra.mxu0 0
    %891 = vmatprep.subr.bf16.mxu0 0
    %892 = vmatpush1.bf16.msra.mxu0 0
    %893 = vmatprep.subr.bf16.mxu0 0
    %894 = vmatpush1.bf16.msra.mxu0 0
    %895 = vmatprep.subr.bf16.mxu0 0
    %896 = vmatpush1.bf16.msra.mxu0 0
    %897 = vmatprep.subr.bf16.mxu0 0
    %898 = vmatpush1.bf16.msra.mxu0 0
    %899 = vmatprep.subr.bf16.mxu0 0
    %900 = vmatpush1.bf16.msra.mxu0 0
    %901 = vmatprep.subr.bf16.mxu0 0
    %902 = vmatpush1.bf16.msra.mxu0 %v886
    %903 = vmatprep.subr.bf16.mxu0 0
    %904 = vmatpush1.bf16.msra.mxu0 %v885
    %905 = vmatprep.subr.bf16.mxu0 0
    %906 = vmatpush2.bf16.msra.mxu0 0
    %907 = vmatprep.subr.bf16.mxu0 0
    %908 = vmatpush2.bf16.msra.mxu0 0
    %909 = vmatprep.subr.bf16.mxu0 0
    %910 = vmatpush2.bf16.msra.mxu0 0
    %911 = vmatprep.subr.bf16.mxu0 0
    %912 = vmatpush2.bf16.msra.mxu0 0
    %913 = vmatprep.subr.bf16.mxu0 0
    %914 = vmatpush2.bf16.msra.mxu0 0
    %915 = vmatprep.subr.bf16.mxu0 0
    %916 = vmatpush2.bf16.msra.mxu0 0
    %917 = vmatprep.subr.bf16.mxu0 0
    %918 = vmatpush2.bf16.msra.mxu0 0
    %919 = vmatprep.subr.bf16.mxu0 0
    %920 = vmatpush2.bf16.msra.mxu0 0
    %921 = vmatprep.mubr.bf16.mxu0 0
    %922 = vmatmul.mubr.bf16.gmra.mxu0 %v829
    %v923 = vpop.f32.mrf.mxu0
    %v924 = vadd.f32 0.0, %v923
    %v925 = vpop.f32.mrf.mxu0
    %v926 = vpop.f32.mrf.mxu0
    %v927 = vadd.f32 0.0, %v926
    %v928 = vpop.f32.mrf.mxu0
    %929 = vdwg.mxu0
    %s930 = scalar_lea.vmem %s4, 16
    %v931 = vld [vmem:[%s930] sm:$0xf]
    %v932 = vld [vmem:[%s930 + $0x4] sm:$0xf]
    %v933 = vld [vmem:[%s930 + $0x8] sm:$0xf]
    %v934 = vld [vmem:[%s930 + $0xc] sm:$0xf]
    %v939 = vunpack.c.l.b16 %v931
    %v940 = vunpack.c.l.b16 %v932
    %v941 = vunpack.c.l.b16 %v933
    %v942 = vunpack.c.l.b16 %v934
    %v943 = vpack.c.b16 %v940, %v939
    %v944 = vpack.c.b16 %v942, %v941
    %947 = vmatprep.subr.bf16.mxu0 0
    %948 = vmatpush1.bf16.msra.mxu0 0
    %949 = vmatprep.subr.bf16.mxu0 0
    %950 = vmatpush1.bf16.msra.mxu0 0
    %951 = vmatprep.subr.bf16.mxu0 0
    %952 = vmatpush1.bf16.msra.mxu0 0
    %953 = vmatprep.subr.bf16.mxu0 0
    %954 = vmatpush1.bf16.msra.mxu0 0
    %955 = vmatprep.subr.bf16.mxu0 0
    %956 = vmatpush1.bf16.msra.mxu0 0
    %957 = vmatprep.subr.bf16.mxu0 0
    %958 = vmatpush1.bf16.msra.mxu0 0
    %959 = vmatprep.subr.bf16.mxu0 0
    %960 = vmatpush1.bf16.msra.mxu0 %v944
    %961 = vmatprep.subr.bf16.mxu0 0
    %962 = vmatpush1.bf16.msra.mxu0 %v943
    %963 = vmatprep.subr.bf16.mxu0 0
    %964 = vmatpush2.bf16.msra.mxu0 0
    %965 = vmatprep.subr.bf16.mxu0 0
    %966 = vmatpush2.bf16.msra.mxu0 0
    %967 = vmatprep.subr.bf16.mxu0 0
    %968 = vmatpush2.bf16.msra.mxu0 0
    %969 = vmatprep.subr.bf16.mxu0 0
    %970 = vmatpush2.bf16.msra.mxu0 0
    %971 = vmatprep.subr.bf16.mxu0 0
    %972 = vmatpush2.bf16.msra.mxu0 0
    %973 = vmatprep.subr.bf16.mxu0 0
    %974 = vmatpush2.bf16.msra.mxu0 0
    %975 = vmatprep.subr.bf16.mxu0 0
    %976 = vmatpush2.bf16.msra.mxu0 0
    %977 = vmatprep.subr.bf16.mxu0 0
    %978 = vmatpush2.bf16.msra.mxu0 0
    %979 = vmatprep.mubr.bf16.mxu0 0
    %980 = vmatmul.mubr.bf16.gmra.mxu0 %v829
    %v981 = vpop.f32.mrf.mxu0
    %v982 = vadd.f32 0.0, %v981
    %v983 = vpop.f32.mrf.mxu0
    %v984 = vpop.f32.mrf.mxu0
    %v985 = vadd.f32 0.0, %v984
    %v986 = vpop.f32.mrf.mxu0
    %987 = vdwg.mxu0
    %v988 = vpack.c.bf16 %v866, %v866
    %v989 = vpack.c.bf16 %v869, %v869
    %v990 = vpack.c.bf16 %v924, %v924
    %v991 = vpack.c.bf16 %v927, %v927
    %v992 = vpack.c.bf16 %v982, %v982
    %v993 = vpack.c.bf16 %v985, %v985
    %v995 = vsel %vm98, %v988, 0
    %v998 = vsel %vm98, %v990, 0
    %1000 = vmatprep.subr.bf16.mxu0 0
    %1001 = vmatpush1.bf16.xpose.msra.mxu0 0
    %1002 = vmatprep.subr.bf16.mxu0 0
    %1003 = vmatpush1.bf16.xpose.msra.mxu0 0
    %1004 = vmatprep.subr.bf16.mxu0 0
    %1005 = vmatpush1.bf16.xpose.msra.mxu0 0
    %1006 = vmatprep.subr.bf16.mxu0 0
    %1007 = vmatpush1.bf16.xpose.msra.mxu0 0
    %1008 = vmatprep.subr.bf16.mxu0 0
    %1009 = vmatpush1.bf16.xpose.msra.mxu0 0
    %1010 = vmatprep.subr.bf16.mxu0 0
    %1011 = vmatpush1.bf16.xpose.msra.mxu0 0
    %1012 = vmatprep.subr.bf16.mxu0 0
    %1013 = vmatpush1.bf16.xpose.msra.mxu0 0
    %1014 = vmatprep.subr.bf16.mxu0 0
    %1015 = vmatpush1.bf16.xpose.msra.mxu0 %v998
    %1016 = vmatprep.subr.bf16.mxu0 0
    %1017 = vmatpush2.bf16.xpose.msra.mxu0 0
    %1018 = vmatprep.subr.bf16.mxu0 0
    %1019 = vmatpush2.bf16.xpose.msra.mxu0 0
    %1020 = vmatprep.subr.bf16.mxu0 0
    %1021 = vmatpush2.bf16.xpose.msra.mxu0 0
    %1022 = vmatprep.subr.bf16.mxu0 0
    %1023 = vmatpush2.bf16.xpose.msra.mxu0 0
    %1024 = vmatprep.subr.bf16.mxu0 0
    %1025 = vmatpush2.bf16.xpose.msra.mxu0 0
    %1026 = vmatprep.subr.bf16.mxu0 0
    %1027 = vmatpush2.bf16.xpose.msra.mxu0 0
    %1028 = vmatprep.subr.bf16.mxu0 0
    %1029 = vmatpush2.bf16.xpose.msra.mxu0 0
    %1030 = vmatprep.subr.bf16.mxu0 0
    %1031 = vmatpush2.bf16.xpose.msra.mxu0 0
    %1032 = vmatprep.mubr.bf16.mxu0 0
    %1033 = vmatmul.mubr.bf16.gmra.mxu0 %v995
    %v1034 = vpop.f32.mrf.mxu0
    %v1035 = vadd.f32 %v79, %v1034
    %v1036 = vpop.f32.mrf.mxu0
    %v1037 = vpop.f32.mrf.mxu0
    %v1038 = vpop.f32.mrf.mxu0
    %1039 = vdwg.mxu0
    %v1041 = vsel %vm98, %v989, 0
    %v1044 = vsel %vm98, %v991, 0
    %1046 = vmatprep.subr.bf16.mxu0 0
    %1047 = vmatpush1.bf16.xpose.msra.mxu0 0
    %1048 = vmatprep.subr.bf16.mxu0 0
    %1049 = vmatpush1.bf16.xpose.msra.mxu0 0
    %1050 = vmatprep.subr.bf16.mxu0 0
    %1051 = vmatpush1.bf16.xpose.msra.mxu0 0
    %1052 = vmatprep.subr.bf16.mxu0 0
    %1053 = vmatpush1.bf16.xpose.msra.mxu0 0
    %1054 = vmatprep.subr.bf16.mxu0 0
    %1055 = vmatpush1.bf16.xpose.msra.mxu0 0
    %1056 = vmatprep.subr.bf16.mxu0 0
    %1057 = vmatpush1.bf16.xpose.msra.mxu0 0
    %1058 = vmatprep.subr.bf16.mxu0 0
    %1059 = vmatpush1.bf16.xpose.msra.mxu0 0
    %1060 = vmatprep.subr.bf16.mxu0 0
    %1061 = vmatpush1.bf16.xpose.msra.mxu0 %v1044
    %1062 = vmatprep.subr.bf16.mxu0 0
    %1063 = vmatpush2.bf16.xpose.msra.mxu0 0
    %1064 = vmatprep.subr.bf16.mxu0 0
    %1065 = vmatpush2.bf16.xpose.msra.mxu0 0
    %1066 = vmatprep.subr.bf16.mxu0 0
    %1067 = vmatpush2.bf16.xpose.msra.mxu0 0
    %1068 = vmatprep.subr.bf16.mxu0 0
    %1069 = vmatpush2.bf16.xpose.msra.mxu0 0
    %1070 = vmatprep.subr.bf16.mxu0 0
    %1071 = vmatpush2.bf16.xpose.msra.mxu0 0
    %1072 = vmatprep.subr.bf16.mxu0 0
    %1073 = vmatpush2.bf16.xpose.msra.mxu0 0
    %1074 = vmatprep.subr.bf16.mxu0 0
    %1075 = vmatpush2.bf16.xpose.msra.mxu0 0
    %1076 = vmatprep.subr.bf16.mxu0 0
    %1077 = vmatpush2.bf16.xpose.msra.mxu0 0
    %1078 = vmatprep.mubr.bf16.mxu0 0
    %1079 = vmatmul.mubr.bf16.gmra.mxu0 %v1041
    %v1080 = vpop.f32.mrf.mxu0
    %v1081 = vadd.f32 %v80, %v1080
    %v1082 = vpop.f32.mrf.mxu0
    %v1083 = vpop.f32.mrf.mxu0
    %v1084 = vpop.f32.mrf.mxu0
    %1085 = vdwg.mxu0
    %v1086 = vsel %vm355, %v1035, -inf
    %1087 = vmax.xlane.f32.xlu0 %v1086
    %v1088 = vpop.xlane.xlu0 %1087
    %v1089 = vsel %vm355, %v1081, -inf
    %1090 = vmax.xlane.f32.xlu0 %v1089
    %v1091 = vpop.xlane.xlu0 %1090
    %v1092 = vsub.f32 %v1035, %v1088
    %v1093 = vsub.f32 %v1081, %v1091
    %v1094 = vmul.f32 %v1092, 1.442695
    %v1095 = vpow.pop %v1094
    %v1096 = vmul.f32 %v1093, 1.442695
    %v1097 = vpow.pop %v1096
    %v1098 = vsel %vm355, %v1095, 0.0
    %1099 = vadd.xlane.f32.xlu0 %v1098
    %v1100 = vpop.xlane.xlu0 %1099
    %v1101 = vsel %vm355, %v1097, 0.0
    %1102 = vadd.xlane.f32.xlu0 %v1101
    %v1103 = vpop.xlane.xlu0 %1102
    %v1104 = vrcp.pop %v1100
    %v1105 = vrcp.pop %v1103
    %v1106 = vmul.f32 %v1095, %v1104
    %v1107 = vmul.f32 %v1097, %v1105
    %v1108 = vpack.c.bf16 %v1106, %v1106
    %v1109 = vpack.c.bf16 %v1107, %v1107
    %v1111 = vsel %vm355, %v1108, 0
    %v1114 = vsel %vm383, %v992, 0
    %1116 = vmatprep.subr.bf16.mxu0 0
    %1117 = vmatpush1.bf16.msra.mxu0 0
    %1118 = vmatprep.subr.bf16.mxu0 0
    %1119 = vmatpush1.bf16.msra.mxu0 0
    %1120 = vmatprep.subr.bf16.mxu0 0
    %1121 = vmatpush1.bf16.msra.mxu0 0
    %1122 = vmatprep.subr.bf16.mxu0 0
    %1123 = vmatpush1.bf16.msra.mxu0 0
    %1124 = vmatprep.subr.bf16.mxu0 0
    %1125 = vmatpush1.bf16.msra.mxu0 0
    %1126 = vmatprep.subr.bf16.mxu0 0
    %1127 = vmatpush1.bf16.msra.mxu0 0
    %1128 = vmatprep.subr.bf16.mxu0 0
    %1129 = vmatpush1.bf16.msra.mxu0 0
    %1130 = vmatprep.subr.bf16.mxu0 0
    %1131 = vmatpush1.bf16.msra.mxu0 %v1114
    %1132 = vmatprep.subr.bf16.mxu0 0
    %1133 = vmatpush2.bf16.msra.mxu0 0
    %1134 = vmatprep.subr.bf16.mxu0 0
    %1135 = vmatpush2.bf16.msra.mxu0 0
    %1136 = vmatprep.subr.bf16.mxu0 0
    %1137 = vmatpush2.bf16.msra.mxu0 0
    %1138 = vmatprep.subr.bf16.mxu0 0
    %1139 = vmatpush2.bf16.msra.mxu0 0
    %1140 = vmatprep.subr.bf16.mxu0 0
    %1141 = vmatpush2.bf16.msra.mxu0 0
    %1142 = vmatprep.subr.bf16.mxu0 0
    %1143 = vmatpush2.bf16.msra.mxu0 0
    %1144 = vmatprep.subr.bf16.mxu0 0
    %1145 = vmatpush2.bf16.msra.mxu0 0
    %1146 = vmatprep.subr.bf16.mxu0 0
    %1147 = vmatpush2.bf16.msra.mxu0 0
    %1148 = vmatprep.mubr.bf16.mxu0 0
    %1149 = vmatmul.mubr.bf16.gmra.mxu0 %v1111
    %v1150 = vpop.f32.mrf.mxu0
    %v1151 = vadd.f32 0.0, %v1150
    %v1152 = vpop.f32.mrf.mxu0
    %v1153 = vpop.f32.mrf.mxu0
    %v1154 = vpop.f32.mrf.mxu0
    %1155 = vdwg.mxu0
    %v1157 = vsel %vm355, %v1109, 0
    %v1160 = vsel %vm383, %v993, 0
    %1162 = vmatprep.subr.bf16.mxu0 0
    %1163 = vmatpush1.bf16.msra.mxu0 0
    %1164 = vmatprep.subr.bf16.mxu0 0
    %1165 = vmatpush1.bf16.msra.mxu0 0
    %1166 = vmatprep.subr.bf16.mxu0 0
    %1167 = vmatpush1.bf16.msra.mxu0 0
    %1168 = vmatprep.subr.bf16.mxu0 0
    %1169 = vmatpush1.bf16.msra.mxu0 0
    %1170 = vmatprep.subr.bf16.mxu0 0
    %1171 = vmatpush1.bf16.msra.mxu0 0
    %1172 = vmatprep.subr.bf16.mxu0 0
    %1173 = vmatpush1.bf16.msra.mxu0 0
    %1174 = vmatprep.subr.bf16.mxu0 0
    %1175 = vmatpush1.bf16.msra.mxu0 0
    %1176 = vmatprep.subr.bf16.mxu0 0
    %1177 = vmatpush1.bf16.msra.mxu0 %v1160
    %1178 = vmatprep.subr.bf16.mxu0 0
    %1179 = vmatpush2.bf16.msra.mxu0 0
    %1180 = vmatprep.subr.bf16.mxu0 0
    %1181 = vmatpush2.bf16.msra.mxu0 0
    %1182 = vmatprep.subr.bf16.mxu0 0
    %1183 = vmatpush2.bf16.msra.mxu0 0
    %1184 = vmatprep.subr.bf16.mxu0 0
    %1185 = vmatpush2.bf16.msra.mxu0 0
    %1186 = vmatprep.subr.bf16.mxu0 0
    %1187 = vmatpush2.bf16.msra.mxu0 0
    %1188 = vmatprep.subr.bf16.mxu0 0
    %1189 = vmatpush2.bf16.msra.mxu0 0
    %1190 = vmatprep.subr.bf16.mxu0 0
    %1191 = vmatpush2.bf16.msra.mxu0 0
    %1192 = vmatprep.subr.bf16.mxu0 0
    %1193 = vmatpush2.bf16.msra.mxu0 0
    %1194 = vmatprep.mubr.bf16.mxu0 0
    %1195 = vmatmul.mubr.bf16.gmra.mxu0 %v1157
    %v1196 = vpop.f32.mrf.mxu0
    %v1197 = vadd.f32 0.0, %v1196
    %v1198 = vpop.f32.mrf.mxu0
    %v1199 = vpop.f32.mrf.mxu0
    %v1200 = vpop.f32.mrf.mxu0
    %1201 = vdwg.mxu0
    %v1202 = vpack.c.bf16 %v1197, %v1151
    %s1203 = scalar_lea.vmem %s5, 16
    %v1204 = vld [vmem:[%s1203] sm:$0xf]
    %v1205 = vld [vmem:[%s1203 + $0x4] sm:$0xf]
    %v1206 = vld [vmem:[%s1203 + $0x8] sm:$0xf]
    %v1207 = vld [vmem:[%s1203 + $0xc] sm:$0xf]
    %v1212 = vunpack.c.l.b16 %v1204
    %v1213 = vunpack.c.l.b16 %v1205
    %v1214 = vunpack.c.l.b16 %v1206
    %v1215 = vunpack.c.l.b16 %v1207
    %v1216 = vpack.c.b16 %v1213, %v1212
    %v1217 = vpack.c.b16 %v1215, %v1214
    %v1221 = vsel %vm98, %v1202, 0
    %1223 = vmatprep.subr.bf16.mxu0 0
    %1224 = vmatpush1.bf16.msra.mxu0 0
    %1225 = vmatprep.subr.bf16.mxu0 0
    %1226 = vmatpush1.bf16.msra.mxu0 0
    %1227 = vmatprep.subr.bf16.mxu0 0
    %1228 = vmatpush1.bf16.msra.mxu0 0
    %1229 = vmatprep.subr.bf16.mxu0 0
    %1230 = vmatpush1.bf16.msra.mxu0 0
    %1231 = vmatprep.subr.bf16.mxu0 0
    %1232 = vmatpush1.bf16.msra.mxu0 0
    %1233 = vmatprep.subr.bf16.mxu0 0
    %1234 = vmatpush1.bf16.msra.mxu0 0
    %1235 = vmatprep.subr.bf16.mxu0 0
    %1236 = vmatpush1.bf16.msra.mxu0 %v1217
    %1237 = vmatprep.subr.bf16.mxu0 0
    %1238 = vmatpush1.bf16.msra.mxu0 %v1216
    %1239 = vmatprep.subr.bf16.mxu0 0
    %1240 = vmatpush2.bf16.msra.mxu0 0
    %1241 = vmatprep.subr.bf16.mxu0 0
    %1242 = vmatpush2.bf16.msra.mxu0 0
    %1243 = vmatprep.subr.bf16.mxu0 0
    %1244 = vmatpush2.bf16.msra.mxu0 0
    %1245 = vmatprep.subr.bf16.mxu0 0
    %1246 = vmatpush2.bf16.msra.mxu0 0
    %1247 = vmatprep.subr.bf16.mxu0 0
    %1248 = vmatpush2.bf16.msra.mxu0 0
    %1249 = vmatprep.subr.bf16.mxu0 0
    %1250 = vmatpush2.bf16.msra.mxu0 0
    %1251 = vmatprep.subr.bf16.mxu0 0
    %1252 = vmatpush2.bf16.msra.mxu0 0
    %1253 = vmatprep.subr.bf16.mxu0 0
    %1254 = vmatpush2.bf16.msra.mxu0 0
    %1255 = vmatprep.mubr.bf16.mxu0 0
    %1256 = vmatmul.mubr.bf16.gmra.mxu0 %v1221
    %v1257 = vpop.f32.mrf.mxu0
    %v1258 = vadd.f32 0.0, %v1257
    %v1259 = vpop.f32.mrf.mxu0
    %v1260 = vpop.f32.mrf.mxu0
    %v1261 = vadd.f32 0.0, %v1260
    %v1262 = vpop.f32.mrf.mxu0
    %1263 = vdwg.mxu0
    %v1264 = vadd.f32 %v808, %v1258
    %v1265 = vadd.f32 %v809, %v1261
    %v1266 = vsel %vm98, %v1264, 0.0
    %1267 = vadd.xlane.f32.xlu0 %v1266
    %v1268 = vpop.xlane.xlu0 %1267
    %v1269 = vsel %vm98, %v1265, 0.0
    %1270 = vadd.xlane.f32.xlu0 %v1269
    %v1271 = vpop.xlane.xlu0 %1270
    %v1272 = vmul.f32 %v1268, %v542
    %v1273 = vmul.f32 %v1271, %v542
    %v1274 = vsub.f32 %v1264, %v1272
    %v1275 = vsub.f32 %v1265, %v1273
    %v1276 = vmul.f32 %v1274, %v1274
    %v1277 = vmul.f32 %v1275, %v1275
    %v1278 = vsel %vm98, %v1276, 0.0
    %1279 = vadd.xlane.f32.xlu0 %v1278
    %v1280 = vpop.xlane.xlu0 %1279
    %v1281 = vsel %vm98, %v1277, 0.0
    %1282 = vadd.xlane.f32.xlu0 %v1281
    %v1283 = vpop.xlane.xlu0 %1282
    %v1284 = vmul.f32 %v1280, %v542
    %v1285 = vmul.f32 %v1283, %v542
    %v1286 = vadd.f32 %v1284, 1e-05
    %v1287 = vadd.f32 %v1285, 1e-05
    %v1288 = vrsqrt.pop %v1286
    %v1289 = vrsqrt.pop %v1287
    %v1290 = vmul.f32 %v1274, %v1288
    %v1291 = vmul.f32 %v1275, %v1289
    %s1292 = scalar_lea.vmem %s6, 1
    %v1293 = vld [vmem:[%s1292] sm:$0x1]
    %v1295 = vlaneseq
    %v1296 = vshrl.u32 %v1295, 7
    %v1297 = vsub.s32 0, %v1296
    %v1298 = vrot.slane %v1293, %v1297
    %v1300 = vmul.f32 %v1290, %v1298
    %v1301 = vmul.f32 %v1291, %v1298
    %s1302 = scalar_lea.vmem %s7, 1
    %v1303 = vld [vmem:[%s1302] sm:$0x1]
    %v1305 = vlaneseq
    %v1306 = vshrl.u32 %v1305, 7
    %v1307 = vsub.s32 0, %v1306
    %v1308 = vrot.slane %v1303, %v1307
    %v1310 = vadd.f32 %v1300, %v1308
    %v1311 = vadd.f32 %v1301, %v1308
    %v1312 = vpack.c.bf16 %v1311, %v1310
    %s1313 = scalar_lea.vmem %s8, 16
    %v1314 = vld [vmem:[%s1313] sm:$0xf]
    %v1315 = vld [vmem:[%s1313 + $0x4] sm:$0xf]
    %v1316 = vld [vmem:[%s1313 + $0x8] sm:$0xf]
    %v1317 = vld [vmem:[%s1313 + $0xc] sm:$0xf]
    %s1318 = scalar_lea.vmem %s9, 1
    %v1319 = vld [vmem:[%s1318] sm:$0x1]
    %v1321 = vlaneseq
    %v1322 = vshrl.u32 %v1321, 7
    %v1323 = vsub.s32 0, %v1322
    %v1324 = vrot.slane %v1319, %v1323
    %v1330 = vunpack.c.l.b16 %v1314
    %v1331 = vunpack.c.l.b16 %v1315
    %v1332 = vunpack.c.l.b16 %v1316
    %v1333 = vunpack.c.l.b16 %v1317
    %v1334 = vpack.c.b16 %v1331, %v1330
    %v1335 = vpack.c.b16 %v1333, %v1332
    %v1339 = vsel %vm98, %v1312, 0
    %1341 = vmatprep.subr.bf16.mxu0 0
    %1342 = vmatpush1.bf16.msra.mxu0 0
    %1343 = vmatprep.subr.bf16.mxu0 0
    %1344 = vmatpush1.bf16.msra.mxu0 0
    %1345 = vmatprep.subr.bf16.mxu0 0
    %1346 = vmatpush1.bf16.msra.mxu0 0
    %1347 = vmatprep.subr.bf16.mxu0 0
    %1348 = vmatpush1.bf16.msra.mxu0 0
    %1349 = vmatprep.subr.bf16.mxu0 0
    %1350 = vmatpush1.bf16.msra.mxu0 0
    %1351 = vmatprep.subr.bf16.mxu0 0
    %1352 = vmatpush1.bf16.msra.mxu0 0
    %1353 = vmatprep.subr.bf16.mxu0 0
    %1354 = vmatpush1.bf16.msra.mxu0 %v1335
    %1355 = vmatprep.subr.bf16.mxu0 0
    %1356 = vmatpush1.bf16.msra.mxu0 %v1334
    %1357 = vmatprep.subr.bf16.mxu0 0
    %1358 = vmatpush2.bf16.msra.mxu0 0
    %1359 = vmatprep.subr.bf16.mxu0 0
    %1360 = vmatpush2.bf16.msra.mxu0 0
    %1361 = vmatprep.subr.bf16.mxu0 0
    %1362 = vmatpush2.bf16.msra.mxu0 0
    %1363 = vmatprep.subr.bf16.mxu0 0
    %1364 = vmatpush2.bf16.msra.mxu0 0
    %1365 = vmatprep.subr.bf16.mxu0 0
    %1366 = vmatpush2.bf16.msra.mxu0 0
    %1367 = vmatprep.subr.bf16.mxu0 0
    %1368 = vmatpush2.bf16.msra.mxu0 0
    %1369 = vmatprep.subr.bf16.mxu0 0
    %1370 = vmatpush2.bf16.msra.mxu0 0
    %1371 = vmatprep.subr.bf16.mxu0 0
    %1372 = vmatpush2.bf16.msra.mxu0 0
    %1373 = vmatprep.mubr.bf16.mxu0 0
    %1374 = vmatmul.mubr.bf16.gmra.mxu0 %v1339
    %v1375 = vpop.f32.mrf.mxu0
    %v1376 = vadd.f32 %v1324, %v1375
    %v1377 = vpop.f32.mrf.mxu0
    %v1378 = vpop.f32.mrf.mxu0
    %v1379 = vadd.f32 %v1324, %v1378
    %v1380 = vpop.f32.mrf.mxu0
    %1381 = vdwg.mxu0
    %v1382 = vmax.f32 %v1376, 0.0
    %v1383 = vmax.f32 %v1379, 0.0
    %v1384 = vpack.c.bf16 %v1383, %v1382
    %s1385 = scalar_lea.vmem %s10, 64
    %v1386 = vld [vmem:[%s1385] sm:$0xf]
    %v1387 = vld [vmem:[%s1385 + $0x4] sm:$0xf]
    %v1388 = vld [vmem:[%s1385 + $0x8] sm:$0xf]
    %v1389 = vld [vmem:[%s1385 + $0xc] sm:$0xf]
    %v1390 = vld [vmem:[%s1385 + $0x10] sm:$0xf]
    %v1391 = vld [vmem:[%s1385 + $0x14] sm:$0xf]
    %v1392 = vld [vmem:[%s1385 + $0x18] sm:$0xf]
    %v1393 = vld [vmem:[%s1385 + $0x1c] sm:$0xf]
    %v1394 = vld [vmem:[%s1385 + $0x20] sm:$0xf]
    %v1395 = vld [vmem:[%s1385 + $0x24] sm:$0xf]
    %v1396 = vld [vmem:[%s1385 + $0x28] sm:$0xf]
    %v1397 = vld [vmem:[%s1385 + $0x2c] sm:$0xf]
    %v1398 = vld [vmem:[%s1385 + $0x30] sm:$0xf]
    %v1399 = vld [vmem:[%s1385 + $0x34] sm:$0xf]
    %v1400 = vld [vmem:[%s1385 + $0x38] sm:$0xf]
    %v1401 = vld [vmem:[%s1385 + $0x3c] sm:$0xf]
    %s1402 = scalar_lea.vmem %s11, 1
    %v1403 = vld [vmem:[%s1402] sm:$0x1]
    %v1405 = vlaneseq
    %v1406 = vshrl.u32 %v1405, 7
    %v1407 = vsub.s32 0, %v1406
    %v1408 = vrot.slane %v1403, %v1407
    %v1426 = vunpack.c.l.b16 %v1386
    %v1427 = vunpack.c.l.b16 %v1387
    %v1428 = vunpack.c.l.b16 %v1388
    %v1429 = vunpack.c.l.b16 %v1389
    %v1430 = vunpack.c.l.b16 %v1390
    %v1431 = vunpack.c.l.b16 %v1391
    %v1432 = vunpack.c.l.b16 %v1392
    %v1433 = vunpack.c.l.b16 %v1393
    %v1434 = vunpack.c.l.b16 %v1394
    %v1435 = vunpack.c.l.b16 %v1395
    %v1436 = vunpack.c.l.b16 %v1396
    %v1437 = vunpack.c.l.b16 %v1397
    %v1438 = vunpack.c.l.b16 %v1398
    %v1439 = vunpack.c.l.b16 %v1399
    %v1440 = vunpack.c.l.b16 %v1400
    %v1441 = vunpack.c.l.b16 %v1401
    %v1442 = vpack.c.b16 %v1427, %v1426
    %v1443 = vpack.c.b16 %v1429, %v1428
    %v1444 = vpack.c.b16 %v1431, %v1430
    %v1445 = vpack.c.b16 %v1433, %v1432
    %v1446 = vpack.c.b16 %v1435, %v1434
    %v1447 = vpack.c.b16 %v1437, %v1436
    %v1448 = vpack.c.b16 %v1439, %v1438
    %v1449 = vpack.c.b16 %v1441, %v1440
    %1458 = vmatprep.subr.bf16.mxu0 0
    %1459 = vmatpush1.bf16.msra.mxu0 %v1449
    %1460 = vmatprep.subr.bf16.mxu0 0
    %1461 = vmatpush1.bf16.msra.mxu0 %v1448
    %1462 = vmatprep.subr.bf16.mxu0 0
    %1463 = vmatpush1.bf16.msra.mxu0 %v1447
    %1464 = vmatprep.subr.bf16.mxu0 0
    %1465 = vmatpush1.bf16.msra.mxu0 %v1446
    %1466 = vmatprep.subr.bf16.mxu0 0
    %1467 = vmatpush1.bf16.msra.mxu0 %v1445
    %1468 = vmatprep.subr.bf16.mxu0 0
    %1469 = vmatpush1.bf16.msra.mxu0 %v1444
    %1470 = vmatprep.subr.bf16.mxu0 0
    %1471 = vmatpush1.bf16.msra.mxu0 %v1443
    %1472 = vmatprep.subr.bf16.mxu0 0
    %1473 = vmatpush1.bf16.msra.mxu0 %v1442
    %1474 = vmatprep.subr.bf16.mxu0 0
    %1475 = vmatpush2.bf16.msra.mxu0 0
    %1476 = vmatprep.subr.bf16.mxu0 0
    %1477 = vmatpush2.bf16.msra.mxu0 0
    %1478 = vmatprep.subr.bf16.mxu0 0
    %1479 = vmatpush2.bf16.msra.mxu0 0
    %1480 = vmatprep.subr.bf16.mxu0 0
    %1481 = vmatpush2.bf16.msra.mxu0 0
    %1482 = vmatprep.subr.bf16.mxu0 0
    %1483 = vmatpush2.bf16.msra.mxu0 0
    %1484 = vmatprep.subr.bf16.mxu0 0
    %1485 = vmatpush2.bf16.msra.mxu0 0
    %1486 = vmatprep.subr.bf16.mxu0 0
    %1487 = vmatpush2.bf16.msra.mxu0 0
    %1488 = vmatprep.subr.bf16.mxu0 0
    %1489 = vmatpush2.bf16.msra.mxu0 0
    %1490 = vmatprep.mubr.bf16.mxu0 0
    %1491 = vmatmul.mubr.bf16.gmra.mxu0 %v1384
    %v1492 = vpop.f32.mrf.mxu0
    %v1493 = vadd.f32 %v1408, %v1492
    %v1494 = vpop.f32.mrf.mxu0
    %v1495 = vpop.f32.mrf.mxu0
    %v1496 = vadd.f32 %v1408, %v1495
    %v1497 = vpop.f32.mrf.mxu0
    %1498 = vdwg.mxu0
    %v1499 = vadd.f32 %v1310, %v1493
    %v1500 = vadd.f32 %v1311, %v1496
    %v1501 = vsel %vm98, %v1499, 0.0
    %1502 = vadd.xlane.f32.xlu0 %v1501
    %v1503 = vpop.xlane.xlu0 %1502
    %v1504 = vsel %vm98, %v1500, 0.0
    %1505 = vadd.xlane.f32.xlu0 %v1504
    %v1506 = vpop.xlane.xlu0 %1505
    %v1507 = vmul.f32 %v1503, %v542
    %v1508 = vmul.f32 %v1506, %v542
    %v1509 = vsub.f32 %v1499, %v1507
    %v1510 = vsub.f32 %v1500, %v1508
    %v1511 = vmul.f32 %v1509, %v1509
    %v1512 = vmul.f32 %v1510, %v1510
    %v1513 = vsel %vm98, %v1511, 0.0
    %1514 = vadd.xlane.f32.xlu0 %v1513
    %v1515 = vpop.xlane.xlu0 %1514
    %v1516 = vsel %vm98, %v1512, 0.0
    %1517 = vadd.xlane.f32.xlu0 %v1516
    %v1518 = vpop.xlane.xlu0 %1517
    %v1519 = vmul.f32 %v1515, %v542
    %v1520 = vmul.f32 %v1518, %v542
    %v1521 = vadd.f32 %v1519, 1e-05
    %v1522 = vadd.f32 %v1520, 1e-05
    %v1523 = vrsqrt.pop %v1521
    %v1524 = vrsqrt.pop %v1522
    %v1525 = vmul.f32 %v1509, %v1523
    %v1526 = vmul.f32 %v1510, %v1524
    %s1527 = scalar_lea.vmem %s12, 1
    %v1528 = vld [vmem:[%s1527] sm:$0x1]
    %v1530 = vlaneseq
    %v1531 = vshrl.u32 %v1530, 7
    %v1532 = vsub.s32 0, %v1531
    %v1533 = vrot.slane %v1528, %v1532
    %v1535 = vmul.f32 %v1525, %v1533
    %v1536 = vmul.f32 %v1526, %v1533
    %s1537 = scalar_lea.vmem %s13, 1
    %v1538 = vld [vmem:[%s1537] sm:$0x1]
    %v1540 = vlaneseq
    %v1541 = vshrl.u32 %v1540, 7
    %v1542 = vsub.s32 0, %v1541
    %v1543 = vrot.slane %v1538, %v1542
    %v1545 = vadd.f32 %v1535, %v1543
    %v1546 = vadd.f32 %v1536, %v1543
    %v1547 = vsel %vm98, %v1545, 0.0
    %v1548 = vrot.slane %v1547, 4
    %v1549 = vadd.f32 %v1547, %v1548
    %v1550 = vrot.slane %v1549, 2
    %v1551 = vadd.f32 %v1549, %v1550
    %v1552 = vrot.slane %v1551, 1
    %v1553 = vadd.f32 %v1551, %v1552
    %v1554 = vsel %vm98, %v1546, 0.0
    %v1555 = vrot.slane %v1554, 4
    %v1556 = vadd.f32 %v1554, %v1555
    %v1557 = vrot.slane %v1556, 2
    %v1558 = vadd.f32 %v1556, %v1557
    %v1559 = vrot.slane %v1558, 1
    %v1560 = vadd.f32 %v1558, %v1559
    %v1561 = vrcp.pop 8.0
    %v1562 = vmul.f32 %v1553, %v1561
    %v1563 = vmul.f32 %v1560, %v1561
    %vm1566 = vcmask 1041409
    %v1567 = vsel %vm1566, %v1563, %v1562
    %vm1569 = vcmask 254976
    %1570 = vst.msk [vmem:[#allocation7] sm:$0x3] %vm1569, %v1567
    // Predicated region
    $region66: #{tpu_custom_call.1} parent=1 // pred_check
      _
    $region67: #{tpu_custom_call.1} parent=1 // pred_check_branch
      %1572 = sbr.rel (0) target = $region69
    $region68: #{tpu_custom_call.1} parent=1 // pred_region
      %s1574 = ssub.s32 32, 32
      %1575 = vsyncadd [#allocation4], %s1574
      %s1577 = sshll.u32 [#allocation7], 4
      %s1578 = int_to_ptr.vmem [resolvable:$true] %s1577
      %1580 = dma.vmem_to_hbm [thread:$0]  %s1578, 32, %s14, [#allocation4]
    $region69: #{tpu_custom_call.1} parent=1 // pred_fallthru
      _
    // Predicated region
    $region70: #{tpu_custom_call.1} parent=1 // pred_check
      _
    $region71: #{tpu_custom_call.1} parent=1 // pred_check_branch
      %1582 = sbr.rel (0) target = $region73
    $region72: #{tpu_custom_call.1} parent=1 // pred_region
      %1583 = dma.done [#allocation4], 32
    $region73: #{tpu_custom_call.1} parent=1 // pred_fallthru
      _
    %1584 = vsyncpa [#allocation3], 1
    %1585 = vsyncpa [#allocation6], 1
    %1586 = vsyncpa [#allocation4], 1

</llo_original>
